<compile_context>
chip_gen: v5e
topology: v5e:2x2
jax: 0.10.0
libtpu: 0.0.40
codegen_flags: <defaults>
</compile_context>

<pallas_src>
import functools

import jax
import jax.numpy as jnp
from jax import lax
from jax.experimental import pallas as pl
from jax.experimental.pallas import tpu as pltpu

_ROW_TILE = 256  # fixed row tile (multiple of 128 -> good for all MXU gens)


# ---------------------------------------------------------------------------
# Kernel 1: fused L2-normalize of both views + fold sqrt(1/tau) + bf16 cast,
#           emitting both (B, D) and transposed (D, B) layouts.
# ---------------------------------------------------------------------------
def _normalize_kernel(x1_ref, x2_ref, z1_ref, z2_ref, z1t_ref, z2t_ref, *,
                      scale):
    for x_ref, z_ref, zt_ref in ((x1_ref, z1_ref, z1t_ref),
                                 (x2_ref, z2_ref, z2t_ref)):
        x = x_ref[...].astype(jnp.float32)
        ssq = jnp.sum(x * x, axis=-1, keepdims=True)
        # F.normalize(p=2, eps=1e-12): x / max(||x||, eps) == x*rsqrt(max(ssq, eps^2))
        inv = lax.rsqrt(jnp.maximum(ssq, jnp.float32(1e-24)))
        z = (x * (inv * jnp.float32(scale))).astype(z_ref.dtype)
        z_ref[...] = z
        zt_ref[...] = z.T   # transposed copy for transpose-free key matmuls


# ---------------------------------------------------------------------------
# Kernel 2: tiled SimCLR loss. Fixed-max logsumexp accumulated over key blocks.
# ---------------------------------------------------------------------------
def _simclr_loss_kernel(z1q_ref, z2q_ref, z1k_ref, z2k_ref, loss_ref,
                        l_a, l_b, *, fixed_max, row_tile, key_tile, valid_b,
                        apply_pad_mask):
    i = pl.program_id(0)          # query-row block (parallel)
    k = pl.program_id(1)          # key block (reduction)
    nk = pl.num_programs(1)

    @pl.when(k == 0)
    def _init():
        l_a[...] = jnp.zeros_like(l_a)
        l_b[...] = jnp.zeros_like(l_b)

    z1q = z1q_ref[...]            # (T, D) bf16, already scaled by sqrt(1/tau)
    z2q = z2q_ref[...]
    z1k = z1k_ref[...]            # (D, K) bf16 (pre-transposed keys)
    z2k = z2k_ref[...]

    # Plain (M,K)x(K,N) bf16 -> f32 MXU matmuls; 1/tau folded into operands.
    s_ab = jnp.dot(z1q, z2k, preferred_element_type=jnp.float32)   # (T, K)
    s_aa = jnp.dot(z1q, z1k, preferred_element_type=jnp.float32)
    s_ba = jnp.dot(z2q, z1k, preferred_element_type=jnp.float32)
    s_bb = jnp.dot(z2q, z2k, preferred_element_type=jnp.float32)

    # masks = I * 1e9 on logits_aa/logits_bb; predicated on global indices so
    # there is no lax.cond copying (T,K) operands.  Padded key columns (only
    # present when B % row_tile != 0) are masked out of every logits block.
    row_g = lax.broadcasted_iota(jnp.int32, (row_tile, key_tile), 0) + i * row_tile
    col_g = lax.broadcasted_iota(jnp.int32, (row_tile, key_tile), 1) + k * key_tile
    diag_pen = jnp.where(row_g == col_g, jnp.float32(1e9), jnp.float32(0.0))
    if apply_pad_mask:
        pad_pen = jnp.where(col_g >= valid_b, jnp.float32(1e9), jnp.float32(0.0))
        s_ab = s_ab - pad_pen
        s_ba = s_ba - pad_pen
        diag_pen = diag_pen + pad_pen
    s_aa = s_aa - diag_pen
    s_bb = s_bb - diag_pen

    # Fixed-max logsumexp: logits <= 1/tau (unit-norm operands), so m=1.01/tau
    # is a safe bound even with bf16 rounding; exp(s - m) <= 1 and the sum over
    # 2B keys fits f32 comfortably.
    m = jnp.float32(fixed_max)
    l_a[...] += (jnp.sum(jnp.exp(s_ab - m), axis=-1, keepdims=True)
                 + jnp.sum(jnp.exp(s_aa - m), axis=-1, keepdims=True))
    l_b[...] += (jnp.sum(jnp.exp(s_ba - m), axis=-1, keepdims=True)
                 + jnp.sum(jnp.exp(s_bb - m), axis=-1, keepdims=True))

    @pl.when(k == nk - 1)
    def _finalize():
        # Positive-pair logit = diag(logits_ab) = diag(logits_ba): row-wise dot
        # of the resident query blocks (1/tau already folded into z).
        tgt = jnp.sum(z1q.astype(jnp.float32) * z2q.astype(jnp.float32),
                      axis=-1, keepdims=True)
        lse_a = m + jnp.log(l_a[...])
        lse_b = m + jnp.log(l_b[...])
        loss_ref[...] = (lse_a - tgt) + (lse_b - tgt)


def simclr_loss(image1, image2, temperature=0.1):
    """SIMCLRLoss.forward for single device (world_size == 1, rank == 0)."""
    assert image1.shape == image2.shape and image1.ndim == 2
    B, D = image1.shape
    T = _ROW_TILE

    # Pad the batch up to a multiple of the fixed row tile; padded rows are
    # zero vectors (normalize -> zero z rows) and padded key columns are
    # masked inside the kernel, padded query rows are sliced off afterwards.
    n = pl.cdiv(B, T)
    B_pad = n * T
    if B_pad != B:
        pad = B_pad - B
        image1 = jnp.pad(image1, ((0, pad), (0, 0)))
        image2 = jnp.pad(image2, ((0, pad), (0, 0)))

    # Key-block width: as wide as possible (256..2048 keys) while dividing
    # B_pad; collapses the key grid entirely for typical SimCLR batches.
    max_keys = 2048 if D <= 512 else 1024          # VMEM budget (v7x-safe)
    kb = max(1, min(n, max_keys // T))
    while n % kb:
        kb -= 1
    K_TILE = kb * T
    nk = n // kb

    scale = float(1.0 / temperature) ** 0.5        # sqrt(1/tau) folded into z
    fixed_max = 1.01 / float(temperature)          # logits <= 1/tau (+ bf16 slack)

    # ---- fused normalize (both views, row + transposed layouts) ------------
    z1, z2, z1t, z2t = pl.pallas_call(
        functools.partial(_normalize_kernel, scale=scale),
        out_shape=(
            jax.ShapeDtypeStruct((B_pad, D), jnp.bfloat16),
            jax.ShapeDtypeStruct((B_pad, D), jnp.bfloat16),
            jax.ShapeDtypeStruct((D, B_pad), jnp.bfloat16),
            jax.ShapeDtypeStruct((D, B_pad), jnp.bfloat16),
        ),
        grid=(n,),
        in_specs=[pl.BlockSpec((T, D), lambda i: (i, 0)),
                  pl.BlockSpec((T, D), lambda i: (i, 0))],
        out_specs=(pl.BlockSpec((T, D), lambda i: (i, 0)),
                   pl.BlockSpec((T, D), lambda i: (i, 0)),
                   pl.BlockSpec((D, T), lambda i: (0, i)),
                   pl.BlockSpec((D, T), lambda i: (0, i))),
        compiler_params=pltpu.CompilerParams(
            dimension_semantics=("parallel",)),
    )(image1, image2)

    # ---- tiled loss ---------------------------------------------------------
    per_row = pl.pallas_call(
        functools.partial(_simclr_loss_kernel,
                          fixed_max=fixed_max, row_tile=T, key_tile=K_TILE,
                          valid_b=B, apply_pad_mask=(B_pad != B)),
        out_shape=jax.ShapeDtypeStruct((B_pad, 1), jnp.float32),
        grid_spec=pltpu.PrefetchScalarGridSpec(
            num_scalar_prefetch=0,
            grid=(n, nk),
            in_specs=[
                pl.BlockSpec((T, D), lambda i, k: (i, 0)),        # z1 row block
                pl.BlockSpec((T, D), lambda i, k: (i, 0)),        # z2 row block
                pl.BlockSpec((D, K_TILE), lambda i, k: (0, k)),   # z1^T key block
                pl.BlockSpec((D, K_TILE), lambda i, k: (0, k)),   # z2^T key block
            ],
            out_specs=pl.BlockSpec((T, 1), lambda i, k: (i, 0)),
            scratch_shapes=[pltpu.VMEM((T, 1), jnp.float32)] * 2,
        ),
        compiler_params=pltpu.CompilerParams(
            dimension_semantics=("parallel", "arbitrary"),
            vmem_limit_bytes=48 * 1024 * 1024),
    )(z1, z2, z1t, z2t)

    # loss = (mean(ce_a) + mean(ce_b)) / 2 over the valid rows only.
    return jnp.sum(per_row[:B, 0]) / jnp.float32(2 * B)


# ---------------------------------------------------------------------------
# Pure-JAX references for the correctness check.
# ---------------------------------------------------------------------------
def _simclr_loss_ref(image1, image2, temperature=0.1, quantize_bf16=False):
    x1 = image1.astype(jnp.float32)
    x2 = image2.astype(jnp.float32)

    def norm(x):
        ssq = jnp.sum(x * x, axis=-1, keepdims=True)
        return x * lax.rsqrt(jnp.maximum(ssq, jnp.float32(1e-24)))

    root_inv_tau = jnp.float32((1.0 / temperature) ** 0.5)
    z1 = norm(x1) * root_inv_tau
    z2 = norm(x2) * root_inv_tau
    if quantize_bf16:
        z1 = z1.astype(jnp.bfloat16).astype(jnp.float32)
        z2 = z2.astype(jnp.bfloat16).astype(jnp.float32)

    B = z1.shape[0]
    hp = lax.Precision.HIGHEST
    mask = jnp.eye(B, dtype=jnp.float32) * jnp.float32(1e9)
    laa = jnp.dot(z1, z1.T, precision=hp) - mask
    lbb = jnp.dot(z2, z2.T, precision=hp) - mask
    lab = jnp.dot(z1, z2.T, precision=hp)
    lba = jnp.dot(z2, z1.T, precision=hp)
    tgt = jnp.sum(z1 * z2, axis=-1)        # diag(lab) == diag(lba)

    def ce(logits):
        m = jnp.max(logits, axis=-1, keepdims=True)
        lse = m[:, 0] + jnp.log(jnp.sum(jnp.exp(logits - m), axis=-1))
        return jnp.mean(lse - tgt)

    loss_a = ce(jnp.concatenate([lab, laa], axis=1))
    loss_b = ce(jnp.concatenate([lba, lbb], axis=1))
    return (loss_a + loss_b) * 0.5


if __name__ == "__main__":
    key = jax.random.PRNGKey(0)
    k1, k2 = jax.random.split(key)

    # Aligned batch (2x1 row grid, collapsed key grid) and a ragged batch
    # (exercises the B -> B_pad padding + key masking path).
    for (B, D) in ((512, 128), (384, 128)):
        image1 = jax.random.normal(k1, (B, D), dtype=jnp.float32)
        image2 = jax.random.normal(k2, (B, D), dtype=jnp.float32)

        loss = jax.block_until_ready(simclr_loss(image1, image2, temperature=0.1))

        ref_bf16 = jax.block_until_ready(
            _simclr_loss_ref(image1, image2, 0.1, quantize_bf16=True))
        ref_f32 = jax.block_until_ready(
            _simclr_loss_ref(image1, image2, 0.1, quantize_bf16=False))

        assert jnp.isfinite(loss), f"non-finite loss for B={B}"
        # Tight check vs. a bf16-operand-matched reference, loose vs. pure f32.
        assert jnp.allclose(loss, ref_bf16, rtol=2e-3, atol=2e-3), \
            (B, float(loss), float(ref_bf16))
        assert jnp.allclose(loss, ref_f32, rtol=2e-2, atol=5e-2), \
            (B, float(loss), float(ref_f32))

    print("KERNEL_OK")
</pallas_src>

<mosaic_0001>
module attributes {stable_mosaic.version = 11 : i64} {
  func.func @_normalize_kernel(%arg0: i32, %arg1: memref<256x128xf32, #tpu.memory_space<vmem>>, %arg2: memref<256x128xf32, #tpu.memory_space<vmem>>, %arg3: memref<256x128xbf16, #tpu.memory_space<vmem>>, %arg4: memref<256x128xbf16, #tpu.memory_space<vmem>>, %arg5: memref<128x256xbf16, #tpu.memory_space<vmem>>, %arg6: memref<128x256xbf16, #tpu.memory_space<vmem>>) attributes {dimension_semantics = [#tpu.dimension_semantics<parallel>], iteration_bounds = array<i64: 2>, scalar_prefetch = 0 : i64, scratch_operands = 0 : i64, tpu.core_type = #tpu.core_type<tc>, window_params = [{transform_indices = @transform_0, window_bounds = array<i64: 256, 128>}, {transform_indices = @transform_1, window_bounds = array<i64: 256, 128>}, {transform_indices = @transform_2, window_bounds = array<i64: 256, 128>}, {transform_indices = @transform_3, window_bounds = array<i64: 256, 128>}, {transform_indices = @transform_4, window_bounds = array<i64: 128, 256>}, {transform_indices = @transform_5, window_bounds = array<i64: 128, 256>}]} {
    %c0 = arith.constant 0 : index
    %c0_0 = arith.constant 0 : index
    %0 = vector.load %arg1[%c0, %c0_0] : memref<256x128xf32, #tpu.memory_space<vmem>>, vector<256x128xf32>
    %1 = arith.mulf %0, %0 : vector<256x128xf32>
    %cst = arith.constant dense<0.000000e+00> : vector<256xf32>
    %2 = vector.multi_reduction <add>, %1, %cst [1] : vector<256x128xf32> to vector<256xf32>
    %3 = vector.shape_cast %2 : vector<256xf32> to vector<256x1xf32>
    %cst_1 = arith.constant 1.000000e-24 : f32
    %4 = vector.broadcast %cst_1 : f32 to vector<256x1xf32>
    %5 = arith.maximumf %3, %4 : vector<256x1xf32>
    %6 = math.rsqrt %5 : vector<256x1xf32>
    %cst_2 = arith.constant 3.1622777 : f32
    %7 = vector.broadcast %cst_2 : f32 to vector<256x1xf32>
    %8 = arith.mulf %6, %7 : vector<256x1xf32>
    %9 = vector.broadcast %8 : vector<256x1xf32> to vector<256x128xf32>
    %10 = arith.mulf %0, %9 : vector<256x128xf32>
    %11 = arith.truncf %10 : vector<256x128xf32> to vector<256x128xbf16>
    %c0_3 = arith.constant 0 : index
    %c0_4 = arith.constant 0 : index
    %12 = vector.load %arg3[%c0_3, %c0_4] : memref<256x128xbf16, #tpu.memory_space<vmem>>, vector<256x128xbf16>
    tpu.vector_store %arg3[%c0_3, %c0_4], %11 {strides = array<i32>} : memref<256x128xbf16, #tpu.memory_space<vmem>>, vector<256x128xbf16>,
    %13 = tpu.transpose %11, [1, 0] : vector<256x128xbf16> -> vector<128x256xbf16>
    %c0_5 = arith.constant 0 : index
    %c0_6 = arith.constant 0 : index
    %14 = vector.load %arg5[%c0_5, %c0_6] : memref<128x256xbf16, #tpu.memory_space<vmem>>, vector<128x256xbf16>
    tpu.vector_store %arg5[%c0_5, %c0_6], %13 {strides = array<i32>} : memref<128x256xbf16, #tpu.memory_space<vmem>>, vector<128x256xbf16>,
    %c0_7 = arith.constant 0 : index
    %c0_8 = arith.constant 0 : index
    %15 = vector.load %arg2[%c0_7, %c0_8] : memref<256x128xf32, #tpu.memory_space<vmem>>, vector<256x128xf32>
    %16 = arith.mulf %15, %15 : vector<256x128xf32>
    %cst_9 = arith.constant dense<0.000000e+00> : vector<256xf32>
    %17 = vector.multi_reduction <add>, %16, %cst_9 [1] : vector<256x128xf32> to vector<256xf32>
    %18 = vector.shape_cast %17 : vector<256xf32> to vector<256x1xf32>
    %cst_10 = arith.constant 1.000000e-24 : f32
    %19 = vector.broadcast %cst_10 : f32 to vector<256x1xf32>
    %20 = arith.maximumf %18, %19 : vector<256x1xf32>
    %21 = math.rsqrt %20 : vector<256x1xf32>
    %cst_11 = arith.constant 3.1622777 : f32
    %22 = vector.broadcast %cst_11 : f32 to vector<256x1xf32>
    %23 = arith.mulf %21, %22 : vector<256x1xf32>
    %24 = vector.broadcast %23 : vector<256x1xf32> to vector<256x128xf32>
    %25 = arith.mulf %15, %24 : vector<256x128xf32>
    %26 = arith.truncf %25 : vector<256x128xf32> to vector<256x128xbf16>
    %c0_12 = arith.constant 0 : index
    %c0_13 = arith.constant 0 : index
    %27 = vector.load %arg4[%c0_12, %c0_13] : memref<256x128xbf16, #tpu.memory_space<vmem>>, vector<256x128xbf16>
    tpu.vector_store %arg4[%c0_12, %c0_13], %26 {strides = array<i32>} : memref<256x128xbf16, #tpu.memory_space<vmem>>, vector<256x128xbf16>,
    %28 = tpu.transpose %26, [1, 0] : vector<256x128xbf16> -> vector<128x256xbf16>
    %c0_14 = arith.constant 0 : index
    %c0_15 = arith.constant 0 : index
    %29 = vector.load %arg6[%c0_14, %c0_15] : memref<128x256xbf16, #tpu.memory_space<vmem>>, vector<128x256xbf16>
    tpu.vector_store %arg6[%c0_14, %c0_15], %28 {strides = array<i32>} : memref<128x256xbf16, #tpu.memory_space<vmem>>, vector<128x256xbf16>,
    return
  }
  func.func @transform_0(%arg0: i32) -> (i32, i32) {
    %c0_i32 = arith.constant 0 : i32
    %c0_i32_0 = arith.constant 0 : i32
    return %arg0, %c0_i32 : i32, i32
  }
  func.func @transform_1(%arg0: i32) -> (i32, i32) {
    %c0_i32 = arith.constant 0 : i32
    %c0_i32_0 = arith.constant 0 : i32
    return %arg0, %c0_i32 : i32, i32
  }
  func.func @transform_2(%arg0: i32) -> (i32, i32) {
    %c0_i32 = arith.constant 0 : i32
    %c0_i32_0 = arith.constant 0 : i32
    return %arg0, %c0_i32 : i32, i32
  }
  func.func @transform_3(%arg0: i32) -> (i32, i32) {
    %c0_i32 = arith.constant 0 : i32
    %c0_i32_0 = arith.constant 0 : i32
    return %arg0, %c0_i32 : i32, i32
  }
  func.func @transform_4(%arg0: i32) -> (i32, i32) {
    %c0_i32 = arith.constant 0 : i32
    %c0_i32_0 = arith.constant 0 : i32
    return %c0_i32, %arg0 : i32, i32
  }
  func.func @transform_5(%arg0: i32) -> (i32, i32) {
    %c0_i32 = arith.constant 0 : i32
    %c0_i32_0 = arith.constant 0 : i32
    return %c0_i32, %arg0 : i32, i32
  }
}

</mosaic_0001>

<llo_original>
// kernel: tpu_custom_call.1
$region0: #{tpu_custom_call.1}
  #allocation0 [shape = 'u32[]', space=smem, size = 0x4, offset = 0x4, fixed_abs, tag = 'smem constant byte address 0x4 - core index']
  #allocation1 [shape = 'u32[72,128]{1,0:T(1,128)}', space=vmem, size = 0x9000, scoped, tag = 'internal scratch']
  %s0 = inlined_call_operand.hbm [shape: f32[512,128], index: 0, kind: input, shape index: {}]
  %s1 = inlined_call_operand.hbm [shape: f32[512,128], index: 1, kind: input, shape index: {}]
  %s2 = inlined_call_operand.hbm [shape: bf16[512,128], index: 2, kind: output, shape index: {0}]
  %s3 = inlined_call_operand.hbm [shape: bf16[512,128], index: 3, kind: output, shape index: {1}]
  %s4 = inlined_call_operand.hbm [shape: bf16[128,512], index: 4, kind: output, shape index: {2}]
  %s5 = inlined_call_operand.hbm [shape: bf16[128,512], index: 5, kind: output, shape index: {3}]
  %6 = xla_tuple %s2, %s3, %s4, %s5
  %s7 = sld [smem:[#allocation0]]
  $region73: #{tpu_custom_call.1} parent=0
    _
  %s9 = ssub.s32 1, %s7
  %s10 = scalar_select 0, %s9, %s7
  $region1: #{tpu_custom_call.1} parent=0
    #allocation2 [shape = 'u8[262144]{0}', space=vmem, size = 0x40000, scoped, tag = 'input window, operand 0']
    #allocation3 [shape = 's32[2]{0}', space=sflag, size = 0x8, scoped, tag = 'scoped memory for tpu_custom_call.1']
    #allocation4 [shape = 's32[2]{0}', space=sflag, size = 0x8, scoped, tag = 'scoped memory for tpu_custom_call.1']
    #allocation5 [shape = 'u8[262144]{0}', space=vmem, size = 0x40000, scoped, tag = 'input window, operand 1']
    #allocation6 [shape = 's32[2]{0}', space=sflag, size = 0x8, scoped, tag = 'scoped memory for tpu_custom_call.1']
    #allocation7 [shape = 'u8[131072]{0}', space=vmem, size = 0x20000, scoped, tag = 'output window, operand 0']
    #allocation8 [shape = 'u8[131072]{0}', space=vmem, size = 0x20000, scoped, tag = 'output window, operand 1']
    #allocation9 [shape = 's32[2]{0}', space=sflag, size = 0x8, scoped, tag = 'scoped memory for tpu_custom_call.1']
    #allocation10 [shape = 'u8[131072]{0}', space=vmem, size = 0x20000, scoped, tag = 'output window, operand 2']
    #allocation11 [shape = 'u8[131072]{0}', space=vmem, size = 0x20000, scoped, tag = 'output window, operand 3']
    #allocation12 [shape = 's32[2]{0}', space=sflag, size = 0x8, scoped, tag = 'scoped memory for tpu_custom_call.1']
    %11 = vsyncpa [#allocation3], 0
    %s12 = scalar_lea.sflag [#allocation3], 1
    %13 = vsyncpa %s12, 0
    %14 = vsyncpa [#allocation6], 0
    %s15 = scalar_lea.sflag [#allocation6], 1
    %16 = vsyncpa %s15, 0
    %17 = vsyncpa [#allocation4], 0
    %s18 = scalar_lea.sflag [#allocation4], 1
    %19 = vsyncpa %s18, 0
    %20 = vsyncpa [#allocation9], 0
    %s21 = scalar_lea.sflag [#allocation9], 1
    %22 = vsyncpa %s21, 0
    %23 = vsyncpa [#allocation12], 0
    %s24 = scalar_lea.sflag [#allocation12], 1
    %25 = vsyncpa %s24, 0
    loop: start=0, step=1, limit=4
    $region2: #{tpu_custom_call.1} parent=1 // loop_pre_header
      _
    $region3: #{tpu_custom_call.1} parent=1 // loop_header
      %s27 = sphi 0, %s31
      %p28 = scmp.ge.s32.totalorder %s27, 4
      %s37 = sphi 0, %s39
      %s40 = sphi 0, %s37
      %s41 = sphi 0, %s40
      %s57 = sphi 0, %s41
      %s63 = sphi 0, %s65
      %s66 = sphi 0, %s63
      %s67 = sphi 0, %s66
      %s83 = sphi 0, %s67
      %s89 = sphi 0, %s91
      %s92 = sphi 0, %s89
      %s93 = sphi 0, %s92
      %s109 = sphi 0, %s93
      %s115 = sphi 0, %s117
      %s118 = sphi 0, %s115
      %s119 = sphi 0, %s118
      %s135 = sphi 0, %s119
      %s141 = sphi 0, %s143
      %s144 = sphi 0, %s141
      %s145 = sphi 0, %s144
      %s161 = sphi 0, %s145
      %s167 = sphi 0, %s169
      %s170 = sphi 0, %s167
      %s171 = sphi 0, %s170
      %s187 = sphi 0, %s171
    $region4: #{tpu_custom_call.1} parent=1 // loop_header_branch
      %30 = sbr.rel (%p28) target = $region8
    $region5: #{tpu_custom_call.1} parent=1 // loop_body
      %s32 = ssub.s32 %s27, 1
      %s33 = ssub.s32 %s27, 2
      %s34 = sadd.s32 %s27, 1
      %s35 = ssub.s32 %s27, %s34
      %p36 = scmp.eq.s32.totalorder %s35, 0
      %s38 = sadd.s32 %s37, 1
      %s39 = scalar_select %p36, %s37, %s38
      %p42 = pneg %p36
      %p43 = scmp.eq.s32.totalorder %s27, 1
      %p44 = por %p42, %p43
      %p45 = scmp.ne.s32.totalorder %s37, %s40
      %p46 = scmp.eq.s32.totalorder %s27, 0
      %p47 = por %p45, %p46
      %p48 = scmp.ne.s32.totalorder %s37, %s40
      %p49 = scmp.eq.s32.totalorder %s32, 1
      %p50 = por %p48, %p49
      %p51 = scmp.ne.s32.totalorder %s40, %s41
      %p52 = scmp.eq.s32.totalorder %s32, 0
      %p53 = por %p51, %p52
      %p54 = scmp.ne.s32.totalorder %s40, %s41
      %p55 = scmp.eq.s32.totalorder %s33, 1
      %p56 = por %p54, %p55
      %p58 = scmp.ne.s32.totalorder %s41, %s57
      %p59 = scmp.eq.s32.totalorder %s33, 0
      %p60 = por %p58, %p59
      %s61 = ssub.s32 %s27, %s34
      %p62 = scmp.eq.s32.totalorder %s61, 0
      %s64 = sadd.s32 %s63, 1
      %s65 = scalar_select %p62, %s63, %s64
      %p68 = pneg %p62
      %p69 = scmp.eq.s32.totalorder %s27, 1
      %p70 = por %p68, %p69
      %p71 = scmp.ne.s32.totalorder %s63, %s66
      %p72 = scmp.eq.s32.totalorder %s27, 0
      %p73 = por %p71, %p72
      %p74 = scmp.ne.s32.totalorder %s63, %s66
      %p75 = scmp.eq.s32.totalorder %s32, 1
      %p76 = por %p74, %p75
      %p77 = scmp.ne.s32.totalorder %s66, %s67
      %p78 = scmp.eq.s32.totalorder %s32, 0
      %p79 = por %p77, %p78
      %p80 = scmp.ne.s32.totalorder %s66, %s67
      %p81 = scmp.eq.s32.totalorder %s33, 1
      %p82 = por %p80, %p81
      %p84 = scmp.ne.s32.totalorder %s67, %s83
      %p85 = scmp.eq.s32.totalorder %s33, 0
      %p86 = por %p84, %p85
      %s87 = ssub.s32 %s27, %s34
      %p88 = scmp.eq.s32.totalorder %s87, 0
      %s90 = sadd.s32 %s89, 1
      %s91 = scalar_select %p88, %s89, %s90
      %p94 = pneg %p88
      %p95 = scmp.eq.s32.totalorder %s27, 1
      %p96 = por %p94, %p95
      %p97 = scmp.ne.s32.totalorder %s89, %s92
      %p98 = scmp.eq.s32.totalorder %s27, 0
      %p99 = por %p97, %p98
      %p100 = scmp.ne.s32.totalorder %s89, %s92
      %p101 = scmp.eq.s32.totalorder %s32, 1
      %p102 = por %p100, %p101
      %p103 = scmp.ne.s32.totalorder %s92, %s93
      %p104 = scmp.eq.s32.totalorder %s32, 0
      %p105 = por %p103, %p104
      %p106 = scmp.ne.s32.totalorder %s92, %s93
      %p107 = scmp.eq.s32.totalorder %s33, 1
      %p108 = por %p106, %p107
      %p110 = scmp.ne.s32.totalorder %s93, %s109
      %p111 = scmp.eq.s32.totalorder %s33, 0
      %p112 = por %p110, %p111
      %s113 = ssub.s32 %s27, %s34
      %p114 = scmp.eq.s32.totalorder %s113, 0
      %s116 = sadd.s32 %s115, 1
      %s117 = scalar_select %p114, %s115, %s116
      %p120 = pneg %p114
      %p121 = scmp.eq.s32.totalorder %s27, 1
      %p122 = por %p120, %p121
      %p123 = scmp.ne.s32.totalorder %s115, %s118
      %p124 = scmp.eq.s32.totalorder %s27, 0
      %p125 = por %p123, %p124
      %p126 = scmp.ne.s32.totalorder %s115, %s118
      %p127 = scmp.eq.s32.totalorder %s32, 1
      %p128 = por %p126, %p127
      %p129 = scmp.ne.s32.totalorder %s118, %s119
      %p130 = scmp.eq.s32.totalorder %s32, 0
      %p131 = por %p129, %p130
      %p132 = scmp.ne.s32.totalorder %s118, %s119
      %p133 = scmp.eq.s32.totalorder %s33, 1
      %p134 = por %p132, %p133
      %p136 = scmp.ne.s32.totalorder %s119, %s135
      %p137 = scmp.eq.s32.totalorder %s33, 0
      %p138 = por %p136, %p137
      %s139 = ssub.s32 %s27, %s34
      %p140 = scmp.eq.s32.totalorder %s139, 0
      %s142 = sadd.s32 %s141, 1
      %s143 = scalar_select %p140, %s141, %s142
      %p146 = pneg %p140
      %p147 = scmp.eq.s32.totalorder %s27, 1
      %p148 = por %p146, %p147
      %p149 = scmp.ne.s32.totalorder %s141, %s144
      %p150 = scmp.eq.s32.totalorder %s27, 0
      %p151 = por %p149, %p150
      %p152 = scmp.ne.s32.totalorder %s141, %s144
      %p153 = scmp.eq.s32.totalorder %s32, 1
      %p154 = por %p152, %p153
      %p155 = scmp.ne.s32.totalorder %s144, %s145
      %p156 = scmp.eq.s32.totalorder %s32, 0
      %p157 = por %p155, %p156
      %p158 = scmp.ne.s32.totalorder %s144, %s145
      %p159 = scmp.eq.s32.totalorder %s33, 1
      %p160 = por %p158, %p159
      %p162 = scmp.ne.s32.totalorder %s145, %s161
      %p163 = scmp.eq.s32.totalorder %s33, 0
      %p164 = por %p162, %p163
      %s165 = ssub.s32 %s27, %s34
      %p166 = scmp.eq.s32.totalorder %s165, 0
      %s168 = sadd.s32 %s167, 1
      %s169 = scalar_select %p166, %s167, %s168
      %p172 = pneg %p166
      %p173 = scmp.eq.s32.totalorder %s27, 1
      %p174 = por %p172, %p173
      %p175 = scmp.ne.s32.totalorder %s167, %s170
      %p176 = scmp.eq.s32.totalorder %s27, 0
      %p177 = por %p175, %p176
      %p178 = scmp.ne.s32.totalorder %s167, %s170
      %p179 = scmp.eq.s32.totalorder %s32, 1
      %p180 = por %p178, %p179
      %p181 = scmp.ne.s32.totalorder %s170, %s171
      %p182 = scmp.eq.s32.totalorder %s32, 0
      %p183 = por %p181, %p182
      %p184 = scmp.ne.s32.totalorder %s170, %s171
      %p185 = scmp.eq.s32.totalorder %s33, 1
      %p186 = por %p184, %p185
      %p188 = scmp.ne.s32.totalorder %s171, %s187
      %p189 = scmp.eq.s32.totalorder %s33, 0
      %p190 = por %p188, %p189
      %p191 = scmp.le.s32.totalorder 1, %s27
      %p192 = scmp.lt.s32.totalorder %s27, 3
      %p193 = pnand %p191, %p192
      %p194 = pneg %p193
      // Predicated region
      $region9: #{tpu_custom_call.1} parent=5 // pred_check
        _
      $region10: #{tpu_custom_call.1} parent=5 // pred_check_branch
        %196 = sbr.rel (%p193) target = $region12
      $region11: #{tpu_custom_call.1} parent=5 // pred_region
        %s197 = ssub.s32 %s27, 1
      $region12: #{tpu_custom_call.1} parent=5 // pred_fallthru
        _
      %p198 = scmp.lt.s32.totalorder %s27, 2
      // Predicated region
      $region13: #{tpu_custom_call.1} parent=5 // pred_check
        %p199 = pneg %p198
      $region14: #{tpu_custom_call.1} parent=5 // pred_check_branch
        %201 = sbr.rel (%p199) target = $region16
      $region15: #{tpu_custom_call.1} parent=5 // pred_region
        // Predicated region
        $region17: #{tpu_custom_call.1} parent=15 // pred_check
          %p202 = pneg %p47
        $region18: #{tpu_custom_call.1} parent=15 // pred_check_branch
          %204 = sbr.rel (%p202) target = $region20
        $region19: #{tpu_custom_call.1} parent=15 // pred_region
          %s205 = sand.u32 %s37, 1
          %s206 = scalar_lea.sflag [#allocation3], %s205
          %s207 = sand.u32 %s37, 1
          %s208 = smul.addr %s207, 256
          %s209 = scalar_lea.vmem [#allocation2], %s208
          %s210 = smul.u32 32, %s27
          %212 = vsyncadd %s206, 0
          %s213 = smul.addr %s210, 8
          %s214 = scalar_lea.hbm %s0, %s213
          %s215 = sshll.u32 %s214, 4
          %s216 = int_to_ptr.hbm [resolvable:$true] %s215
          %s217 = sshll.u32 %s209, 4
          %s218 = int_to_ptr.vmem [resolvable:$true] %s217
          %223 = dma.hbm_to_vmem [thread:$0]  %s216, 4096, %s218, %s206, 128, 128, 8
        $region20: #{tpu_custom_call.1} parent=15 // pred_fallthru
          _
        // Predicated region
        $region21: #{tpu_custom_call.1} parent=15 // pred_check
          %p224 = pneg %p73
        $region22: #{tpu_custom_call.1} parent=15 // pred_check_branch
          %226 = sbr.rel (%p224) target = $region24
        $region23: #{tpu_custom_call.1} parent=15 // pred_region
          %s227 = sand.u32 %s63, 1
          %s228 = scalar_lea.sflag [#allocation6], %s227
          %s229 = sand.u32 %s63, 1
          %s230 = smul.addr %s229, 256
          %s231 = scalar_lea.vmem [#allocation5], %s230
          %s232 = smul.u32 32, %s27
          %234 = vsyncadd %s228, 0
          %s235 = smul.addr %s232, 8
          %s236 = scalar_lea.hbm %s1, %s235
          %s237 = sshll.u32 %s236, 4
          %s238 = int_to_ptr.hbm [resolvable:$true] %s237
          %s239 = sshll.u32 %s231, 4
          %s240 = int_to_ptr.vmem [resolvable:$true] %s239
          %245 = dma.hbm_to_vmem [thread:$0]  %s238, 4096, %s240, %s228, 128, 128, 8
        $region24: #{tpu_custom_call.1} parent=15 // pred_fallthru
          _
      $region16: #{tpu_custom_call.1} parent=5 // pred_fallthru
        _
      %p246 = scmp.le.s32.totalorder 1, %s27
      %p247 = scmp.lt.s32.totalorder %s27, 3
      %p248 = pnand %p246, %p247
      %p249 = pneg %p248
      // Predicated region
      $region25: #{tpu_custom_call.1} parent=5 // pred_check
        _
      $region26: #{tpu_custom_call.1} parent=5 // pred_check_branch
        %251 = sbr.rel (%p248) target = $region28
      $region27: #{tpu_custom_call.1} parent=5 // pred_region
        %s252 = ssub.s32 %s27, 1
        %s253 = sand.u32 %s40, 1
        %s254 = scalar_lea.sflag [#allocation3], %s253
        %s255 = sand.u32 %s40, 1
        %s256 = smul.addr %s255, 256
        %s257 = scalar_lea.vmem [#allocation2], %s256
        // Predicated region
        $region29: #{tpu_custom_call.1} parent=27 // pred_check
          %p258 = pneg %p53
        $region30: #{tpu_custom_call.1} parent=27 // pred_check_branch
          %260 = sbr.rel (%p258) target = $region32
        $region31: #{tpu_custom_call.1} parent=27 // pred_region
          %262 = dma.done %s254, 4096
        $region32: #{tpu_custom_call.1} parent=27 // pred_fallthru
          _
        %s263 = sand.u32 %s66, 1
        %s264 = scalar_lea.sflag [#allocation6], %s263
        %s265 = sand.u32 %s66, 1
        %s266 = smul.addr %s265, 256
        %s267 = scalar_lea.vmem [#allocation5], %s266
        // Predicated region
        $region33: #{tpu_custom_call.1} parent=27 // pred_check
          %p268 = pneg %p79
        $region34: #{tpu_custom_call.1} parent=27 // pred_check_branch
          %270 = sbr.rel (%p268) target = $region36
        $region35: #{tpu_custom_call.1} parent=27 // pred_region
          %272 = dma.done %s264, 4096
        $region36: #{tpu_custom_call.1} parent=27 // pred_fallthru
          _
        %s273 = sand.u32 %s40, 1
        %s274 = scalar_lea.sflag [#allocation3], %s273
        %s275 = sand.u32 %s40, 1
        %s276 = smul.addr %s275, 256
        %s277 = scalar_lea.vmem [#allocation2], %s276
        %p278 = pneg %p53
        %p279 = pneg %p50
        %s280 = sand.u32 %s66, 1
        %s281 = scalar_lea.sflag [#allocation6], %s280
        %s282 = sand.u32 %s66, 1
        %s283 = smul.addr %s282, 256
        %s284 = scalar_lea.vmem [#allocation5], %s283
        %p285 = pneg %p79
        %p286 = pneg %p76
        %p287 = pneg %p105
        %p288 = pneg %p102
        %s289 = sand.u32 %s92, 1
        %s290 = scalar_lea.sflag [#allocation4], %s289
        %s291 = sand.u32 %s92, 1
        %s292 = smul.addr %s291, 128
        %s293 = scalar_lea.vmem [#allocation7], %s292
        %p294 = pneg %p131
        %p295 = pneg %p128
        %s296 = sand.u32 %s32, 1
        %s297 = scalar_lea.sflag [#allocation9], %s296
        %s298 = sand.u32 %s118, 1
        %s299 = smul.addr %s298, 128
        %s300 = scalar_lea.vmem [#allocation8], %s299
        %p301 = pneg %p157
        %p302 = pneg %p154
        %s303 = sand.u32 %s32, 1
        %s304 = scalar_lea.sflag [#allocation9], %s303
        %s305 = sand.u32 %s144, 1
        %s306 = smul.addr %s305, 128
        %s307 = scalar_lea.vmem [#allocation10], %s306
        %p308 = pneg %p183
        %p309 = pneg %p180
        %s310 = sand.u32 %s170, 1
        %s311 = scalar_lea.sflag [#allocation12], %s310
        %s312 = sand.u32 %s170, 1
        %s313 = smul.addr %s312, 128
        %s314 = scalar_lea.vmem [#allocation11], %s313
        %s315 = smul.u32 32, %s32
        %s316 = smul.u32 32, %s32
        %s317 = smul.u32 32, %s32
        %s318 = smul.u32 32, %s32
        %s319 = smul.u32 2, %s32
        %s320 = smul.u32 2, %s32
        %v321 = vld [vmem:[%s257] sm:$0xff]
        %v322 = vld [vmem:[%s257 + $0x8] sm:$0xff]
        %v323 = vld [vmem:[%s257 + $0x10] sm:$0xff]
        %v324 = vld [vmem:[%s257 + $0x18] sm:$0xff]
        %v325 = vld [vmem:[%s257 + $0x20] sm:$0xff]
        %v326 = vld [vmem:[%s257 + $0x28] sm:$0xff]
        %v327 = vld [vmem:[%s257 + $0x30] sm:$0xff]
        %v328 = vld [vmem:[%s257 + $0x38] sm:$0xff]
        %v329 = vld [vmem:[%s257 + $0x40] sm:$0xff]
        %v330 = vld [vmem:[%s257 + $0x48] sm:$0xff]
        %v331 = vld [vmem:[%s257 + $0x50] sm:$0xff]
        %v332 = vld [vmem:[%s257 + $0x58] sm:$0xff]
        %v333 = vld [vmem:[%s257 + $0x60] sm:$0xff]
        %v334 = vld [vmem:[%s257 + $0x68] sm:$0xff]
        %v335 = vld [vmem:[%s257 + $0x70] sm:$0xff]
        %v336 = vld [vmem:[%s257 + $0x78] sm:$0xff]
        %v337 = vld [vmem:[%s257 + $0x80] sm:$0xff]
        %v338 = vld [vmem:[%s257 + $0x88] sm:$0xff]
        %v339 = vld [vmem:[%s257 + $0x90] sm:$0xff]
        %v340 = vld [vmem:[%s257 + $0x98] sm:$0xff]
        %v341 = vld [vmem:[%s257 + $0xa0] sm:$0xff]
        %v342 = vld [vmem:[%s257 + $0xa8] sm:$0xff]
        %v343 = vld [vmem:[%s257 + $0xb0] sm:$0xff]
        %v344 = vld [vmem:[%s257 + $0xb8] sm:$0xff]
        %v345 = vld [vmem:[%s257 + $0xc0] sm:$0xff]
        %v346 = vld [vmem:[%s257 + $0xc8] sm:$0xff]
        %v347 = vld [vmem:[%s257 + $0xd0] sm:$0xff]
        %v348 = vld [vmem:[%s257 + $0xd8] sm:$0xff]
        %v349 = vld [vmem:[%s257 + $0xe0] sm:$0xff]
        %v350 = vld [vmem:[%s257 + $0xe8] sm:$0xff]
        %v351 = vld [vmem:[%s257 + $0xf0] sm:$0xff]
        %v352 = vld [vmem:[%s257 + $0xf8] sm:$0xff]
        %v353 = vmul.f32 %v321, %v321
        %v354 = vmul.f32 %v322, %v322
        %v355 = vmul.f32 %v323, %v323
        %v356 = vmul.f32 %v324, %v324
        %v357 = vmul.f32 %v325, %v325
        %v358 = vmul.f32 %v326, %v326
        %v359 = vmul.f32 %v327, %v327
        %v360 = vmul.f32 %v328, %v328
        %v361 = vmul.f32 %v329, %v329
        %v362 = vmul.f32 %v330, %v330
        %v363 = vmul.f32 %v331, %v331
        %v364 = vmul.f32 %v332, %v332
        %v365 = vmul.f32 %v333, %v333
        %v366 = vmul.f32 %v334, %v334
        %v367 = vmul.f32 %v335, %v335
        %v368 = vmul.f32 %v336, %v336
        %v369 = vmul.f32 %v337, %v337
        %v370 = vmul.f32 %v338, %v338
        %v371 = vmul.f32 %v339, %v339
        %v372 = vmul.f32 %v340, %v340
        %v373 = vmul.f32 %v341, %v341
        %v374 = vmul.f32 %v342, %v342
        %v375 = vmul.f32 %v343, %v343
        %v376 = vmul.f32 %v344, %v344
        %v377 = vmul.f32 %v345, %v345
        %v378 = vmul.f32 %v346, %v346
        %v379 = vmul.f32 %v347, %v347
        %v380 = vmul.f32 %v348, %v348
        %v381 = vmul.f32 %v349, %v349
        %v382 = vmul.f32 %v350, %v350
        %v383 = vmul.f32 %v351, %v351
        %v384 = vmul.f32 %v352, %v352
        %385 = vadd.xlane.f32.xlu0 %v353
        %v386 = vpop.xlane.xlu0 %385
        %387 = vadd.xlane.f32.xlu0 %v354
        %v388 = vpop.xlane.xlu0 %387
        %389 = vadd.xlane.f32.xlu0 %v355
        %v390 = vpop.xlane.xlu0 %389
        %391 = vadd.xlane.f32.xlu0 %v356
        %v392 = vpop.xlane.xlu0 %391
        %393 = vadd.xlane.f32.xlu0 %v357
        %v394 = vpop.xlane.xlu0 %393
        %395 = vadd.xlane.f32.xlu0 %v358
        %v396 = vpop.xlane.xlu0 %395
        %397 = vadd.xlane.f32.xlu0 %v359
        %v398 = vpop.xlane.xlu0 %397
        %399 = vadd.xlane.f32.xlu0 %v360
        %v400 = vpop.xlane.xlu0 %399
        %401 = vadd.xlane.f32.xlu0 %v361
        %v402 = vpop.xlane.xlu0 %401
        %403 = vadd.xlane.f32.xlu0 %v362
        %v404 = vpop.xlane.xlu0 %403
        %405 = vadd.xlane.f32.xlu0 %v363
        %v406 = vpop.xlane.xlu0 %405
        %407 = vadd.xlane.f32.xlu0 %v364
        %v408 = vpop.xlane.xlu0 %407
        %409 = vadd.xlane.f32.xlu0 %v365
        %v410 = vpop.xlane.xlu0 %409
        %411 = vadd.xlane.f32.xlu0 %v366
        %v412 = vpop.xlane.xlu0 %411
        %413 = vadd.xlane.f32.xlu0 %v367
        %v414 = vpop.xlane.xlu0 %413
        %415 = vadd.xlane.f32.xlu0 %v368
        %v416 = vpop.xlane.xlu0 %415
        %417 = vadd.xlane.f32.xlu0 %v369
        %v418 = vpop.xlane.xlu0 %417
        %419 = vadd.xlane.f32.xlu0 %v370
        %v420 = vpop.xlane.xlu0 %419
        %421 = vadd.xlane.f32.xlu0 %v371
        %v422 = vpop.xlane.xlu0 %421
        %423 = vadd.xlane.f32.xlu0 %v372
        %v424 = vpop.xlane.xlu0 %423
        %425 = vadd.xlane.f32.xlu0 %v373
        %v426 = vpop.xlane.xlu0 %425
        %427 = vadd.xlane.f32.xlu0 %v374
        %v428 = vpop.xlane.xlu0 %427
        %429 = vadd.xlane.f32.xlu0 %v375
        %v430 = vpop.xlane.xlu0 %429
        %431 = vadd.xlane.f32.xlu0 %v376
        %v432 = vpop.xlane.xlu0 %431
        %433 = vadd.xlane.f32.xlu0 %v377
        %v434 = vpop.xlane.xlu0 %433
        %435 = vadd.xlane.f32.xlu0 %v378
        %v436 = vpop.xlane.xlu0 %435
        %437 = vadd.xlane.f32.xlu0 %v379
        %v438 = vpop.xlane.xlu0 %437
        %439 = vadd.xlane.f32.xlu0 %v380
        %v440 = vpop.xlane.xlu0 %439
        %441 = vadd.xlane.f32.xlu0 %v381
        %v442 = vpop.xlane.xlu0 %441
        %443 = vadd.xlane.f32.xlu0 %v382
        %v444 = vpop.xlane.xlu0 %443
        %445 = vadd.xlane.f32.xlu0 %v383
        %v446 = vpop.xlane.xlu0 %445
        %447 = vadd.xlane.f32.xlu0 %v384
        %v448 = vpop.xlane.xlu0 %447
        %v449 = vmax.f32 %v386, 1e-24
        %v450 = vmax.f32 %v388, 1e-24
        %v451 = vmax.f32 %v390, 1e-24
        %v452 = vmax.f32 %v392, 1e-24
        %v453 = vmax.f32 %v394, 1e-24
        %v454 = vmax.f32 %v396, 1e-24
        %v455 = vmax.f32 %v398, 1e-24
        %v456 = vmax.f32 %v400, 1e-24
        %v457 = vmax.f32 %v402, 1e-24
        %v458 = vmax.f32 %v404, 1e-24
        %v459 = vmax.f32 %v406, 1e-24
        %v460 = vmax.f32 %v408, 1e-24
        %v461 = vmax.f32 %v410, 1e-24
        %v462 = vmax.f32 %v412, 1e-24
        %v463 = vmax.f32 %v414, 1e-24
        %v464 = vmax.f32 %v416, 1e-24
        %v465 = vmax.f32 %v418, 1e-24
        %v466 = vmax.f32 %v420, 1e-24
        %v467 = vmax.f32 %v422, 1e-24
        %v468 = vmax.f32 %v424, 1e-24
        %v469 = vmax.f32 %v426, 1e-24
        %v470 = vmax.f32 %v428, 1e-24
        %v471 = vmax.f32 %v430, 1e-24
        %v472 = vmax.f32 %v432, 1e-24
        %v473 = vmax.f32 %v434, 1e-24
        %v474 = vmax.f32 %v436, 1e-24
        %v475 = vmax.f32 %v438, 1e-24
        %v476 = vmax.f32 %v440, 1e-24
        %v477 = vmax.f32 %v442, 1e-24
        %v478 = vmax.f32 %v444, 1e-24
        %v479 = vmax.f32 %v446, 1e-24
        %v480 = vmax.f32 %v448, 1e-24
        %v481 = vrsqrt.pop %v449
        %v482 = vmul.f32 %v481, %v449
        %v483 = vmul.f32 %v482, %v481
        %v484 = vmul.f32 0.5, %v483
        %v485 = vsub.f32 1.5, %v484
        %v486 = vmul.f32 %v481, %v485
        %vm487 = vweird.f32 %v449
        %vm488 = vweird.f32 %v481
        %vm489 = vmor %vm487, %vm488
        %v490 = vsel %vm489, %v481, %v486
        %v491 = vrsqrt.pop %v450
        %v492 = vmul.f32 %v491, %v450
        %v493 = vmul.f32 %v492, %v491
        %v494 = vmul.f32 0.5, %v493
        %v495 = vsub.f32 1.5, %v494
        %v496 = vmul.f32 %v491, %v495
        %vm497 = vweird.f32 %v450
        %vm498 = vweird.f32 %v491
        %vm499 = vmor %vm497, %vm498
        %v500 = vsel %vm499, %v491, %v496
        %v501 = vrsqrt.pop %v451
        %v502 = vmul.f32 %v501, %v451
        %v503 = vmul.f32 %v502, %v501
        %v504 = vmul.f32 0.5, %v503
        %v505 = vsub.f32 1.5, %v504
        %v506 = vmul.f32 %v501, %v505
        %vm507 = vweird.f32 %v451
        %vm508 = vweird.f32 %v501
        %vm509 = vmor %vm507, %vm508
        %v510 = vsel %vm509, %v501, %v506
        %v511 = vrsqrt.pop %v452
        %v512 = vmul.f32 %v511, %v452
        %v513 = vmul.f32 %v512, %v511
        %v514 = vmul.f32 0.5, %v513
        %v515 = vsub.f32 1.5, %v514
        %v516 = vmul.f32 %v511, %v515
        %vm517 = vweird.f32 %v452
        %vm518 = vweird.f32 %v511
        %vm519 = vmor %vm517, %vm518
        %v520 = vsel %vm519, %v511, %v516
        %v521 = vrsqrt.pop %v453
        %v522 = vmul.f32 %v521, %v453
        %v523 = vmul.f32 %v522, %v521
        %v524 = vmul.f32 0.5, %v523
        %v525 = vsub.f32 1.5, %v524
        %v526 = vmul.f32 %v521, %v525
        %vm527 = vweird.f32 %v453
        %vm528 = vweird.f32 %v521
        %vm529 = vmor %vm527, %vm528
        %v530 = vsel %vm529, %v521, %v526
        %v531 = vrsqrt.pop %v454
        %v532 = vmul.f32 %v531, %v454
        %v533 = vmul.f32 %v532, %v531
        %v534 = vmul.f32 0.5, %v533
        %v535 = vsub.f32 1.5, %v534
        %v536 = vmul.f32 %v531, %v535
        %vm537 = vweird.f32 %v454
        %vm538 = vweird.f32 %v531
        %vm539 = vmor %vm537, %vm538
        %v540 = vsel %vm539, %v531, %v536
        %v541 = vrsqrt.pop %v455
        %v542 = vmul.f32 %v541, %v455
        %v543 = vmul.f32 %v542, %v541
        %v544 = vmul.f32 0.5, %v543
        %v545 = vsub.f32 1.5, %v544
        %v546 = vmul.f32 %v541, %v545
        %vm547 = vweird.f32 %v455
        %vm548 = vweird.f32 %v541
        %vm549 = vmor %vm547, %vm548
        %v550 = vsel %vm549, %v541, %v546
        %v551 = vrsqrt.pop %v456
        %v552 = vmul.f32 %v551, %v456
        %v553 = vmul.f32 %v552, %v551
        %v554 = vmul.f32 0.5, %v553
        %v555 = vsub.f32 1.5, %v554
        %v556 = vmul.f32 %v551, %v555
        %vm557 = vweird.f32 %v456
        %vm558 = vweird.f32 %v551
        %vm559 = vmor %vm557, %vm558
        %v560 = vsel %vm559, %v551, %v556
        %v561 = vrsqrt.pop %v457
        %v562 = vmul.f32 %v561, %v457
        %v563 = vmul.f32 %v562, %v561
        %v564 = vmul.f32 0.5, %v563
        %v565 = vsub.f32 1.5, %v564
        %v566 = vmul.f32 %v561, %v565
        %vm567 = vweird.f32 %v457
        %vm568 = vweird.f32 %v561
        %vm569 = vmor %vm567, %vm568
        %v570 = vsel %vm569, %v561, %v566
        %v571 = vrsqrt.pop %v458
        %v572 = vmul.f32 %v571, %v458
        %v573 = vmul.f32 %v572, %v571
        %v574 = vmul.f32 0.5, %v573
        %v575 = vsub.f32 1.5, %v574
        %v576 = vmul.f32 %v571, %v575
        %vm577 = vweird.f32 %v458
        %vm578 = vweird.f32 %v571
        %vm579 = vmor %vm577, %vm578
        %v580 = vsel %vm579, %v571, %v576
        %v581 = vrsqrt.pop %v459
        %v582 = vmul.f32 %v581, %v459
        %v583 = vmul.f32 %v582, %v581
        %v584 = vmul.f32 0.5, %v583
        %v585 = vsub.f32 1.5, %v584
        %v586 = vmul.f32 %v581, %v585
        %vm587 = vweird.f32 %v459
        %vm588 = vweird.f32 %v581
        %vm589 = vmor %vm587, %vm588
        %v590 = vsel %vm589, %v581, %v586
        %v591 = vrsqrt.pop %v460
        %v592 = vmul.f32 %v591, %v460
        %v593 = vmul.f32 %v592, %v591
        %v594 = vmul.f32 0.5, %v593
        %v595 = vsub.f32 1.5, %v594
        %v596 = vmul.f32 %v591, %v595
        %vm597 = vweird.f32 %v460
        %vm598 = vweird.f32 %v591
        %vm599 = vmor %vm597, %vm598
        %v600 = vsel %vm599, %v591, %v596
        %v601 = vrsqrt.pop %v461
        %v602 = vmul.f32 %v601, %v461
        %v603 = vmul.f32 %v602, %v601
        %v604 = vmul.f32 0.5, %v603
        %v605 = vsub.f32 1.5, %v604
        %v606 = vmul.f32 %v601, %v605
        %vm607 = vweird.f32 %v461
        %vm608 = vweird.f32 %v601
        %vm609 = vmor %vm607, %vm608
        %v610 = vsel %vm609, %v601, %v606
        %v611 = vrsqrt.pop %v462
        %v612 = vmul.f32 %v611, %v462
        %v613 = vmul.f32 %v612, %v611
        %v614 = vmul.f32 0.5, %v613
        %v615 = vsub.f32 1.5, %v614
        %v616 = vmul.f32 %v611, %v615
        %vm617 = vweird.f32 %v462
        %vm618 = vweird.f32 %v611
        %vm619 = vmor %vm617, %vm618
        %v620 = vsel %vm619, %v611, %v616
        %v621 = vrsqrt.pop %v463
        %v622 = vmul.f32 %v621, %v463
        %v623 = vmul.f32 %v622, %v621
        %v624 = vmul.f32 0.5, %v623
        %v625 = vsub.f32 1.5, %v624
        %v626 = vmul.f32 %v621, %v625
        %vm627 = vweird.f32 %v463
        %vm628 = vweird.f32 %v621
        %vm629 = vmor %vm627, %vm628
        %v630 = vsel %vm629, %v621, %v626
        %v631 = vrsqrt.pop %v464
        %v632 = vmul.f32 %v631, %v464
        %v633 = vmul.f32 %v632, %v631
        %v634 = vmul.f32 0.5, %v633
        %v635 = vsub.f32 1.5, %v634
        %v636 = vmul.f32 %v631, %v635
        %vm637 = vweird.f32 %v464
        %vm638 = vweird.f32 %v631
        %vm639 = vmor %vm637, %vm638
        %v640 = vsel %vm639, %v631, %v636
        %v641 = vrsqrt.pop %v465
        %v642 = vmul.f32 %v641, %v465
        %v643 = vmul.f32 %v642, %v641
        %v644 = vmul.f32 0.5, %v643
        %v645 = vsub.f32 1.5, %v644
        %v646 = vmul.f32 %v641, %v645
        %vm647 = vweird.f32 %v465
        %vm648 = vweird.f32 %v641
        %vm649 = vmor %vm647, %vm648
        %v650 = vsel %vm649, %v641, %v646
        %v651 = vrsqrt.pop %v466
        %v652 = vmul.f32 %v651, %v466
        %v653 = vmul.f32 %v652, %v651
        %v654 = vmul.f32 0.5, %v653
        %v655 = vsub.f32 1.5, %v654
        %v656 = vmul.f32 %v651, %v655
        %vm657 = vweird.f32 %v466
        %vm658 = vweird.f32 %v651
        %vm659 = vmor %vm657, %vm658
        %v660 = vsel %vm659, %v651, %v656
        %v661 = vrsqrt.pop %v467
        %v662 = vmul.f32 %v661, %v467
        %v663 = vmul.f32 %v662, %v661
        %v664 = vmul.f32 0.5, %v663
        %v665 = vsub.f32 1.5, %v664
        %v666 = vmul.f32 %v661, %v665
        %vm667 = vweird.f32 %v467
        %vm668 = vweird.f32 %v661
        %vm669 = vmor %vm667, %vm668
        %v670 = vsel %vm669, %v661, %v666
        %v671 = vrsqrt.pop %v468
        %v672 = vmul.f32 %v671, %v468
        %v673 = vmul.f32 %v672, %v671
        %v674 = vmul.f32 0.5, %v673
        %v675 = vsub.f32 1.5, %v674
        %v676 = vmul.f32 %v671, %v675
        %vm677 = vweird.f32 %v468
        %vm678 = vweird.f32 %v671
        %vm679 = vmor %vm677, %vm678
        %v680 = vsel %vm679, %v671, %v676
        %v681 = vrsqrt.pop %v469
        %v682 = vmul.f32 %v681, %v469
        %v683 = vmul.f32 %v682, %v681
        %v684 = vmul.f32 0.5, %v683
        %v685 = vsub.f32 1.5, %v684
        %v686 = vmul.f32 %v681, %v685
        %vm687 = vweird.f32 %v469
        %vm688 = vweird.f32 %v681
        %vm689 = vmor %vm687, %vm688
        %v690 = vsel %vm689, %v681, %v686
        %v691 = vrsqrt.pop %v470
        %v692 = vmul.f32 %v691, %v470
        %v693 = vmul.f32 %v692, %v691
        %v694 = vmul.f32 0.5, %v693
        %v695 = vsub.f32 1.5, %v694
        %v696 = vmul.f32 %v691, %v695
        %vm697 = vweird.f32 %v470
        %vm698 = vweird.f32 %v691
        %vm699 = vmor %vm697, %vm698
        %v700 = vsel %vm699, %v691, %v696
        %v701 = vrsqrt.pop %v471
        %v702 = vmul.f32 %v701, %v471
        %v703 = vmul.f32 %v702, %v701
        %v704 = vmul.f32 0.5, %v703
        %v705 = vsub.f32 1.5, %v704
        %v706 = vmul.f32 %v701, %v705
        %vm707 = vweird.f32 %v471
        %vm708 = vweird.f32 %v701
        %vm709 = vmor %vm707, %vm708
        %v710 = vsel %vm709, %v701, %v706
        %v711 = vrsqrt.pop %v472
        %v712 = vmul.f32 %v711, %v472
        %v713 = vmul.f32 %v712, %v711
        %v714 = vmul.f32 0.5, %v713
        %v715 = vsub.f32 1.5, %v714
        %v716 = vmul.f32 %v711, %v715
        %vm717 = vweird.f32 %v472
        %vm718 = vweird.f32 %v711
        %vm719 = vmor %vm717, %vm718
        %v720 = vsel %vm719, %v711, %v716
        %v721 = vrsqrt.pop %v473
        %v722 = vmul.f32 %v721, %v473
        %v723 = vmul.f32 %v722, %v721
        %v724 = vmul.f32 0.5, %v723
        %v725 = vsub.f32 1.5, %v724
        %v726 = vmul.f32 %v721, %v725
        %vm727 = vweird.f32 %v473
        %vm728 = vweird.f32 %v721
        %vm729 = vmor %vm727, %vm728
        %v730 = vsel %vm729, %v721, %v726
        %v731 = vrsqrt.pop %v474
        %v732 = vmul.f32 %v731, %v474
        %v733 = vmul.f32 %v732, %v731
        %v734 = vmul.f32 0.5, %v733
        %v735 = vsub.f32 1.5, %v734
        %v736 = vmul.f32 %v731, %v735
        %vm737 = vweird.f32 %v474
        %vm738 = vweird.f32 %v731
        %vm739 = vmor %vm737, %vm738
        %v740 = vsel %vm739, %v731, %v736
        %v741 = vrsqrt.pop %v475
        %v742 = vmul.f32 %v741, %v475
        %v743 = vmul.f32 %v742, %v741
        %v744 = vmul.f32 0.5, %v743
        %v745 = vsub.f32 1.5, %v744
        %v746 = vmul.f32 %v741, %v745
        %vm747 = vweird.f32 %v475
        %vm748 = vweird.f32 %v741
        %vm749 = vmor %vm747, %vm748
        %v750 = vsel %vm749, %v741, %v746
        %v751 = vrsqrt.pop %v476
        %v752 = vmul.f32 %v751, %v476
        %v753 = vmul.f32 %v752, %v751
        %v754 = vmul.f32 0.5, %v753
        %v755 = vsub.f32 1.5, %v754
        %v756 = vmul.f32 %v751, %v755
        %vm757 = vweird.f32 %v476
        %vm758 = vweird.f32 %v751
        %vm759 = vmor %vm757, %vm758
        %v760 = vsel %vm759, %v751, %v756
        %v761 = vrsqrt.pop %v477
        %v762 = vmul.f32 %v761, %v477
        %v763 = vmul.f32 %v762, %v761
        %v764 = vmul.f32 0.5, %v763
        %v765 = vsub.f32 1.5, %v764
        %v766 = vmul.f32 %v761, %v765
        %vm767 = vweird.f32 %v477
        %vm768 = vweird.f32 %v761
        %vm769 = vmor %vm767, %vm768
        %v770 = vsel %vm769, %v761, %v766
        %v771 = vrsqrt.pop %v478
        %v772 = vmul.f32 %v771, %v478
        %v773 = vmul.f32 %v772, %v771
        %v774 = vmul.f32 0.5, %v773
        %v775 = vsub.f32 1.5, %v774
        %v776 = vmul.f32 %v771, %v775
        %vm777 = vweird.f32 %v478
        %vm778 = vweird.f32 %v771
        %vm779 = vmor %vm777, %vm778
        %v780 = vsel %vm779, %v771, %v776
        %v781 = vrsqrt.pop %v479
        %v782 = vmul.f32 %v781, %v479
        %v783 = vmul.f32 %v782, %v781
        %v784 = vmul.f32 0.5, %v783
        %v785 = vsub.f32 1.5, %v784
        %v786 = vmul.f32 %v781, %v785
        %vm787 = vweird.f32 %v479
        %vm788 = vweird.f32 %v781
        %vm789 = vmor %vm787, %vm788
        %v790 = vsel %vm789, %v781, %v786
        %v791 = vrsqrt.pop %v480
        %v792 = vmul.f32 %v791, %v480
        %v793 = vmul.f32 %v792, %v791
        %v794 = vmul.f32 0.5, %v793
        %v795 = vsub.f32 1.5, %v794
        %v796 = vmul.f32 %v791, %v795
        %vm797 = vweird.f32 %v480
        %vm798 = vweird.f32 %v791
        %vm799 = vmor %vm797, %vm798
        %v800 = vsel %vm799, %v791, %v796
        %v801 = vmul.f32 %v490, 3.1622777
        %v802 = vmul.f32 %v500, 3.1622777
        %v803 = vmul.f32 %v510, 3.1622777
        %v804 = vmul.f32 %v520, 3.1622777
        %v805 = vmul.f32 %v530, 3.1622777
        %v806 = vmul.f32 %v540, 3.1622777
        %v807 = vmul.f32 %v550, 3.1622777
        %v808 = vmul.f32 %v560, 3.1622777
        %v809 = vmul.f32 %v570, 3.1622777
        %v810 = vmul.f32 %v580, 3.1622777
        %v811 = vmul.f32 %v590, 3.1622777
        %v812 = vmul.f32 %v600, 3.1622777
        %v813 = vmul.f32 %v610, 3.1622777
        %v814 = vmul.f32 %v620, 3.1622777
        %v815 = vmul.f32 %v630, 3.1622777
        %v816 = vmul.f32 %v640, 3.1622777
        %v817 = vmul.f32 %v650, 3.1622777
        %v818 = vmul.f32 %v660, 3.1622777
        %v819 = vmul.f32 %v670, 3.1622777
        %v820 = vmul.f32 %v680, 3.1622777
        %v821 = vmul.f32 %v690, 3.1622777
        %v822 = vmul.f32 %v700, 3.1622777
        %v823 = vmul.f32 %v710, 3.1622777
        %v824 = vmul.f32 %v720, 3.1622777
        %v825 = vmul.f32 %v730, 3.1622777
        %v826 = vmul.f32 %v740, 3.1622777
        %v827 = vmul.f32 %v750, 3.1622777
        %v828 = vmul.f32 %v760, 3.1622777
        %v829 = vmul.f32 %v770, 3.1622777
        %v830 = vmul.f32 %v780, 3.1622777
        %v831 = vmul.f32 %v790, 3.1622777
        %v832 = vmul.f32 %v800, 3.1622777
        %v833 = vmul.f32 %v321, %v801
        %v834 = vmul.f32 %v322, %v802
        %v835 = vmul.f32 %v323, %v803
        %v836 = vmul.f32 %v324, %v804
        %v837 = vmul.f32 %v325, %v805
        %v838 = vmul.f32 %v326, %v806
        %v839 = vmul.f32 %v327, %v807
        %v840 = vmul.f32 %v328, %v808
        %v841 = vmul.f32 %v329, %v809
        %v842 = vmul.f32 %v330, %v810
        %v843 = vmul.f32 %v331, %v811
        %v844 = vmul.f32 %v332, %v812
        %v845 = vmul.f32 %v333, %v813
        %v846 = vmul.f32 %v334, %v814
        %v847 = vmul.f32 %v335, %v815
        %v848 = vmul.f32 %v336, %v816
        %v849 = vmul.f32 %v337, %v817
        %v850 = vmul.f32 %v338, %v818
        %v851 = vmul.f32 %v339, %v819
        %v852 = vmul.f32 %v340, %v820
        %v853 = vmul.f32 %v341, %v821
        %v854 = vmul.f32 %v342, %v822
        %v855 = vmul.f32 %v343, %v823
        %v856 = vmul.f32 %v344, %v824
        %v857 = vmul.f32 %v345, %v825
        %v858 = vmul.f32 %v346, %v826
        %v859 = vmul.f32 %v347, %v827
        %v860 = vmul.f32 %v348, %v828
        %v861 = vmul.f32 %v349, %v829
        %v862 = vmul.f32 %v350, %v830
        %v863 = vmul.f32 %v351, %v831
        %v864 = vmul.f32 %v352, %v832
        %v865 = vpack.c.bf16 %v833, %v833
        %v866 = vpack.c.bf16 %v834, %v834
        %v867 = vpack.c.bf16 %v835, %v835
        %v868 = vpack.c.bf16 %v836, %v836
        %v869 = vpack.c.bf16 %v837, %v837
        %v870 = vpack.c.bf16 %v838, %v838
        %v871 = vpack.c.bf16 %v839, %v839
        %v872 = vpack.c.bf16 %v840, %v840
        %v873 = vpack.c.bf16 %v841, %v841
        %v874 = vpack.c.bf16 %v842, %v842
        %v875 = vpack.c.bf16 %v843, %v843
        %v876 = vpack.c.bf16 %v844, %v844
        %v877 = vpack.c.bf16 %v845, %v845
        %v878 = vpack.c.bf16 %v846, %v846
        %v879 = vpack.c.bf16 %v847, %v847
        %v880 = vpack.c.bf16 %v848, %v848
        %v881 = vpack.c.bf16 %v849, %v849
        %v882 = vpack.c.bf16 %v850, %v850
        %v883 = vpack.c.bf16 %v851, %v851
        %v884 = vpack.c.bf16 %v852, %v852
        %v885 = vpack.c.bf16 %v853, %v853
        %v886 = vpack.c.bf16 %v854, %v854
        %v887 = vpack.c.bf16 %v855, %v855
        %v888 = vpack.c.bf16 %v856, %v856
        %v889 = vpack.c.bf16 %v857, %v857
        %v890 = vpack.c.bf16 %v858, %v858
        %v891 = vpack.c.bf16 %v859, %v859
        %v892 = vpack.c.bf16 %v860, %v860
        %v893 = vpack.c.bf16 %v861, %v861
        %v894 = vpack.c.bf16 %v862, %v862
        %v895 = vpack.c.bf16 %v863, %v863
        %v896 = vpack.c.bf16 %v864, %v864
        %897 = vst [vmem:[%s293] sm:$0xf] %v865
        %898 = vst [vmem:[%s293 + $0x4] sm:$0xf] %v866
        %899 = vst [vmem:[%s293 + $0x8] sm:$0xf] %v867
        %900 = vst [vmem:[%s293 + $0xc] sm:$0xf] %v868
        %901 = vst [vmem:[%s293 + $0x10] sm:$0xf] %v869
        %902 = vst [vmem:[%s293 + $0x14] sm:$0xf] %v870
        %903 = vst [vmem:[%s293 + $0x18] sm:$0xf] %v871
        %904 = vst [vmem:[%s293 + $0x1c] sm:$0xf] %v872
        %905 = vst [vmem:[%s293 + $0x20] sm:$0xf] %v873
        %906 = vst [vmem:[%s293 + $0x24] sm:$0xf] %v874
        %907 = vst [vmem:[%s293 + $0x28] sm:$0xf] %v875
        %908 = vst [vmem:[%s293 + $0x2c] sm:$0xf] %v876
        %909 = vst [vmem:[%s293 + $0x30] sm:$0xf] %v877
        %910 = vst [vmem:[%s293 + $0x34] sm:$0xf] %v878
        %911 = vst [vmem:[%s293 + $0x38] sm:$0xf] %v879
        %912 = vst [vmem:[%s293 + $0x3c] sm:$0xf] %v880
        %913 = vst [vmem:[%s293 + $0x40] sm:$0xf] %v881
        %914 = vst [vmem:[%s293 + $0x44] sm:$0xf] %v882
        %915 = vst [vmem:[%s293 + $0x48] sm:$0xf] %v883
        %916 = vst [vmem:[%s293 + $0x4c] sm:$0xf] %v884
        %917 = vst [vmem:[%s293 + $0x50] sm:$0xf] %v885
        %918 = vst [vmem:[%s293 + $0x54] sm:$0xf] %v886
        %919 = vst [vmem:[%s293 + $0x58] sm:$0xf] %v887
        %920 = vst [vmem:[%s293 + $0x5c] sm:$0xf] %v888
        %921 = vst [vmem:[%s293 + $0x60] sm:$0xf] %v889
        %922 = vst [vmem:[%s293 + $0x64] sm:$0xf] %v890
        %923 = vst [vmem:[%s293 + $0x68] sm:$0xf] %v891
        %924 = vst [vmem:[%s293 + $0x6c] sm:$0xf] %v892
        %925 = vst [vmem:[%s293 + $0x70] sm:$0xf] %v893
        %926 = vst [vmem:[%s293 + $0x74] sm:$0xf] %v894
        %927 = vst [vmem:[%s293 + $0x78] sm:$0xf] %v895
        %928 = vst [vmem:[%s293 + $0x7c] sm:$0xf] %v896
        %v961 = vunpack.c.l.b16 %v865
        %v962 = vunpack.c.l.b16 %v866
        %v963 = vunpack.c.l.b16 %v867
        %v964 = vunpack.c.l.b16 %v868
        %v965 = vunpack.c.l.b16 %v869
        %v966 = vunpack.c.l.b16 %v870
        %v967 = vunpack.c.l.b16 %v871
        %v968 = vunpack.c.l.b16 %v872
        %v969 = vunpack.c.l.b16 %v873
        %v970 = vunpack.c.l.b16 %v874
        %v971 = vunpack.c.l.b16 %v875
        %v972 = vunpack.c.l.b16 %v876
        %v973 = vunpack.c.l.b16 %v877
        %v974 = vunpack.c.l.b16 %v878
        %v975 = vunpack.c.l.b16 %v879
        %v976 = vunpack.c.l.b16 %v880
        %v977 = vunpack.c.l.b16 %v881
        %v978 = vunpack.c.l.b16 %v882
        %v979 = vunpack.c.l.b16 %v883
        %v980 = vunpack.c.l.b16 %v884
        %v981 = vunpack.c.l.b16 %v885
        %v982 = vunpack.c.l.b16 %v886
        %v983 = vunpack.c.l.b16 %v887
        %v984 = vunpack.c.l.b16 %v888
        %v985 = vunpack.c.l.b16 %v889
        %v986 = vunpack.c.l.b16 %v890
        %v987 = vunpack.c.l.b16 %v891
        %v988 = vunpack.c.l.b16 %v892
        %v989 = vunpack.c.l.b16 %v893
        %v990 = vunpack.c.l.b16 %v894
        %v991 = vunpack.c.l.b16 %v895
        %v992 = vunpack.c.l.b16 %v896
        %v993 = vpack.c.b16 %v962, %v961
        %v994 = vpack.c.b16 %v964, %v963
        %v995 = vpack.c.b16 %v966, %v965
        %v996 = vpack.c.b16 %v968, %v967
        %v997 = vpack.c.b16 %v970, %v969
        %v998 = vpack.c.b16 %v972, %v971
        %v999 = vpack.c.b16 %v974, %v973
        %v1000 = vpack.c.b16 %v976, %v975
        %v1001 = vpack.c.b16 %v978, %v977
        %v1002 = vpack.c.b16 %v980, %v979
        %v1003 = vpack.c.b16 %v982, %v981
        %v1004 = vpack.c.b16 %v984, %v983
        %v1005 = vpack.c.b16 %v986, %v985
        %v1006 = vpack.c.b16 %v988, %v987
        %v1007 = vpack.c.b16 %v990, %v989
        %v1008 = vpack.c.b16 %v992, %v991
        %1025 = vxpose.xlu0.c.b16.start [1/8] %v993, 128
        %1026 = vxpose.xlu0.c.b16.cont [2/8] %v994, 128
        %1027 = vxpose.xlu0.c.b16.cont [3/8] %v995, 128
        %1028 = vxpose.xlu0.c.b16.cont [4/8] %v996, 128
        %1029 = vxpose.xlu0.c.b16.cont [5/8] %v997, 128
        %1030 = vxpose.xlu0.c.b16.cont [6/8] %v998, 128
        %1031 = vxpose.xlu0.c.b16.cont [7/8] %v999, 128
        %1032 = vxpose.xlu0.c.b16.end [8/8] %v1000, 128
        %v1033 = vpop.trf.xlu0
        %v1034 = vpop.trf.xlu0
        %v1035 = vpop.trf.xlu0
        %v1036 = vpop.trf.xlu0
        %v1037 = vpop.trf.xlu0
        %v1038 = vpop.trf.xlu0
        %v1039 = vpop.trf.xlu0
        %v1040 = vpop.trf.xlu0
        %1041 = vxpose.xlu0.c.b16.start [1/8] %v1001, 128
        %1042 = vxpose.xlu0.c.b16.cont [2/8] %v1002, 128
        %1043 = vxpose.xlu0.c.b16.cont [3/8] %v1003, 128
        %1044 = vxpose.xlu0.c.b16.cont [4/8] %v1004, 128
        %1045 = vxpose.xlu0.c.b16.cont [5/8] %v1005, 128
        %1046 = vxpose.xlu0.c.b16.cont [6/8] %v1006, 128
        %1047 = vxpose.xlu0.c.b16.cont [7/8] %v1007, 128
        %1048 = vxpose.xlu0.c.b16.end [8/8] %v1008, 128
        %v1049 = vpop.trf.xlu0
        %v1050 = vpop.trf.xlu0
        %v1051 = vpop.trf.xlu0
        %v1052 = vpop.trf.xlu0
        %v1053 = vpop.trf.xlu0
        %v1054 = vpop.trf.xlu0
        %v1055 = vpop.trf.xlu0
        %v1056 = vpop.trf.xlu0
        %v1073 = vunpack.c.l.b16 %v1033
        %v1074 = vunpack.c.l.b16 %v1049
        %v1075 = vunpack.c.h.b16 %v1033
        %v1076 = vunpack.c.h.b16 %v1049
        %v1077 = vunpack.c.l.b16 %v1034
        %v1078 = vunpack.c.l.b16 %v1050
        %v1079 = vunpack.c.h.b16 %v1034
        %v1080 = vunpack.c.h.b16 %v1050
        %v1081 = vunpack.c.l.b16 %v1035
        %v1082 = vunpack.c.l.b16 %v1051
        %v1083 = vunpack.c.h.b16 %v1035
        %v1084 = vunpack.c.h.b16 %v1051
        %v1085 = vunpack.c.l.b16 %v1036
        %v1086 = vunpack.c.l.b16 %v1052
        %v1087 = vunpack.c.h.b16 %v1036
        %v1088 = vunpack.c.h.b16 %v1052
        %v1089 = vunpack.c.l.b16 %v1037
        %v1090 = vunpack.c.l.b16 %v1053
        %v1091 = vunpack.c.h.b16 %v1037
        %v1092 = vunpack.c.h.b16 %v1053
        %v1093 = vunpack.c.l.b16 %v1038
        %v1094 = vunpack.c.l.b16 %v1054
        %v1095 = vunpack.c.h.b16 %v1038
        %v1096 = vunpack.c.h.b16 %v1054
        %v1097 = vunpack.c.l.b16 %v1039
        %v1098 = vunpack.c.l.b16 %v1055
        %v1099 = vunpack.c.h.b16 %v1039
        %v1100 = vunpack.c.h.b16 %v1055
        %v1101 = vunpack.c.l.b16 %v1040
        %v1102 = vunpack.c.l.b16 %v1056
        %v1103 = vunpack.c.h.b16 %v1040
        %v1104 = vunpack.c.h.b16 %v1056
        %v1105 = vpack.c.b16 %v1074, %v1073
        %v1106 = vpack.c.b16 %v1076, %v1075
        %v1107 = vpack.c.b16 %v1078, %v1077
        %v1108 = vpack.c.b16 %v1080, %v1079
        %v1109 = vpack.c.b16 %v1082, %v1081
        %v1110 = vpack.c.b16 %v1084, %v1083
        %v1111 = vpack.c.b16 %v1086, %v1085
        %v1112 = vpack.c.b16 %v1088, %v1087
        %v1113 = vpack.c.b16 %v1090, %v1089
        %v1114 = vpack.c.b16 %v1092, %v1091
        %v1115 = vpack.c.b16 %v1094, %v1093
        %v1116 = vpack.c.b16 %v1096, %v1095
        %v1117 = vpack.c.b16 %v1098, %v1097
        %v1118 = vpack.c.b16 %v1100, %v1099
        %v1119 = vpack.c.b16 %v1102, %v1101
        %v1120 = vpack.c.b16 %v1104, %v1103
        %1137 = vst [vmem:[%s307] sm:$0xff] %v1105
        %1138 = vst [vmem:[%s307 + $0x8] sm:$0xff] %v1106
        %1139 = vst [vmem:[%s307 + $0x10] sm:$0xff] %v1107
        %1140 = vst [vmem:[%s307 + $0x18] sm:$0xff] %v1108
        %1141 = vst [vmem:[%s307 + $0x20] sm:$0xff] %v1109
        %1142 = vst [vmem:[%s307 + $0x28] sm:$0xff] %v1110
        %1143 = vst [vmem:[%s307 + $0x30] sm:$0xff] %v1111
        %1144 = vst [vmem:[%s307 + $0x38] sm:$0xff] %v1112
        %1145 = vst [vmem:[%s307 + $0x40] sm:$0xff] %v1113
        %1146 = vst [vmem:[%s307 + $0x48] sm:$0xff] %v1114
        %1147 = vst [vmem:[%s307 + $0x50] sm:$0xff] %v1115
        %1148 = vst [vmem:[%s307 + $0x58] sm:$0xff] %v1116
        %1149 = vst [vmem:[%s307 + $0x60] sm:$0xff] %v1117
        %1150 = vst [vmem:[%s307 + $0x68] sm:$0xff] %v1118
        %1151 = vst [vmem:[%s307 + $0x70] sm:$0xff] %v1119
        %1152 = vst [vmem:[%s307 + $0x78] sm:$0xff] %v1120
        %v1153 = vld [vmem:[%s267] sm:$0xff]
        %v1154 = vld [vmem:[%s267 + $0x8] sm:$0xff]
        %v1155 = vld [vmem:[%s267 + $0x10] sm:$0xff]
        %v1156 = vld [vmem:[%s267 + $0x18] sm:$0xff]
        %v1157 = vld [vmem:[%s267 + $0x20] sm:$0xff]
        %v1158 = vld [vmem:[%s267 + $0x28] sm:$0xff]
        %v1159 = vld [vmem:[%s267 + $0x30] sm:$0xff]
        %v1160 = vld [vmem:[%s267 + $0x38] sm:$0xff]
        %v1161 = vld [vmem:[%s267 + $0x40] sm:$0xff]
        %v1162 = vld [vmem:[%s267 + $0x48] sm:$0xff]
        %v1163 = vld [vmem:[%s267 + $0x50] sm:$0xff]
        %v1164 = vld [vmem:[%s267 + $0x58] sm:$0xff]
        %v1165 = vld [vmem:[%s267 + $0x60] sm:$0xff]
        %v1166 = vld [vmem:[%s267 + $0x68] sm:$0xff]
        %v1167 = vld [vmem:[%s267 + $0x70] sm:$0xff]
        %v1168 = vld [vmem:[%s267 + $0x78] sm:$0xff]
        %v1169 = vld [vmem:[%s267 + $0x80] sm:$0xff]
        %v1170 = vld [vmem:[%s267 + $0x88] sm:$0xff]
        %v1171 = vld [vmem:[%s267 + $0x90] sm:$0xff]
        %v1172 = vld [vmem:[%s267 + $0x98] sm:$0xff]
        %v1173 = vld [vmem:[%s267 + $0xa0] sm:$0xff]
        %v1174 = vld [vmem:[%s267 + $0xa8] sm:$0xff]
        %v1175 = vld [vmem:[%s267 + $0xb0] sm:$0xff]
        %v1176 = vld [vmem:[%s267 + $0xb8] sm:$0xff]
        %v1177 = vld [vmem:[%s267 + $0xc0] sm:$0xff]
        %v1178 = vld [vmem:[%s267 + $0xc8] sm:$0xff]
        %v1179 = vld [vmem:[%s267 + $0xd0] sm:$0xff]
        %v1180 = vld [vmem:[%s267 + $0xd8] sm:$0xff]
        %v1181 = vld [vmem:[%s267 + $0xe0] sm:$0xff]
        %v1182 = vld [vmem:[%s267 + $0xe8] sm:$0xff]
        %v1183 = vld [vmem:[%s267 + $0xf0] sm:$0xff]
        %v1184 = vld [vmem:[%s267 + $0xf8] sm:$0xff]
        %v1185 = vmul.f32 %v1153, %v1153
        %v1186 = vmul.f32 %v1154, %v1154
        %v1187 = vmul.f32 %v1155, %v1155
        %v1188 = vmul.f32 %v1156, %v1156
        %v1189 = vmul.f32 %v1157, %v1157
        %v1190 = vmul.f32 %v1158, %v1158
        %v1191 = vmul.f32 %v1159, %v1159
        %v1192 = vmul.f32 %v1160, %v1160
        %v1193 = vmul.f32 %v1161, %v1161
        %v1194 = vmul.f32 %v1162, %v1162
        %v1195 = vmul.f32 %v1163, %v1163
        %v1196 = vmul.f32 %v1164, %v1164
        %v1197 = vmul.f32 %v1165, %v1165
        %v1198 = vmul.f32 %v1166, %v1166
        %v1199 = vmul.f32 %v1167, %v1167
        %v1200 = vmul.f32 %v1168, %v1168
        %v1201 = vmul.f32 %v1169, %v1169
        %v1202 = vmul.f32 %v1170, %v1170
        %v1203 = vmul.f32 %v1171, %v1171
        %v1204 = vmul.f32 %v1172, %v1172
        %v1205 = vmul.f32 %v1173, %v1173
        %v1206 = vmul.f32 %v1174, %v1174
        %v1207 = vmul.f32 %v1175, %v1175
        %v1208 = vmul.f32 %v1176, %v1176
        %v1209 = vmul.f32 %v1177, %v1177
        %v1210 = vmul.f32 %v1178, %v1178
        %v1211 = vmul.f32 %v1179, %v1179
        %v1212 = vmul.f32 %v1180, %v1180
        %v1213 = vmul.f32 %v1181, %v1181
        %v1214 = vmul.f32 %v1182, %v1182
        %v1215 = vmul.f32 %v1183, %v1183
        %v1216 = vmul.f32 %v1184, %v1184
        %1217 = vadd.xlane.f32.xlu0 %v1185
        %v1218 = vpop.xlane.xlu0 %1217
        %1219 = vadd.xlane.f32.xlu0 %v1186
        %v1220 = vpop.xlane.xlu0 %1219
        %1221 = vadd.xlane.f32.xlu0 %v1187
        %v1222 = vpop.xlane.xlu0 %1221
        %1223 = vadd.xlane.f32.xlu0 %v1188
        %v1224 = vpop.xlane.xlu0 %1223
        %1225 = vadd.xlane.f32.xlu0 %v1189
        %v1226 = vpop.xlane.xlu0 %1225
        %1227 = vadd.xlane.f32.xlu0 %v1190
        %v1228 = vpop.xlane.xlu0 %1227
        %1229 = vadd.xlane.f32.xlu0 %v1191
        %v1230 = vpop.xlane.xlu0 %1229
        %1231 = vadd.xlane.f32.xlu0 %v1192
        %v1232 = vpop.xlane.xlu0 %1231
        %1233 = vadd.xlane.f32.xlu0 %v1193
        %v1234 = vpop.xlane.xlu0 %1233
        %1235 = vadd.xlane.f32.xlu0 %v1194
        %v1236 = vpop.xlane.xlu0 %1235
        %1237 = vadd.xlane.f32.xlu0 %v1195
        %v1238 = vpop.xlane.xlu0 %1237
        %1239 = vadd.xlane.f32.xlu0 %v1196
        %v1240 = vpop.xlane.xlu0 %1239
        %1241 = vadd.xlane.f32.xlu0 %v1197
        %v1242 = vpop.xlane.xlu0 %1241
        %1243 = vadd.xlane.f32.xlu0 %v1198
        %v1244 = vpop.xlane.xlu0 %1243
        %1245 = vadd.xlane.f32.xlu0 %v1199
        %v1246 = vpop.xlane.xlu0 %1245
        %1247 = vadd.xlane.f32.xlu0 %v1200
        %v1248 = vpop.xlane.xlu0 %1247
        %1249 = vadd.xlane.f32.xlu0 %v1201
        %v1250 = vpop.xlane.xlu0 %1249
        %1251 = vadd.xlane.f32.xlu0 %v1202
        %v1252 = vpop.xlane.xlu0 %1251
        %1253 = vadd.xlane.f32.xlu0 %v1203
        %v1254 = vpop.xlane.xlu0 %1253
        %1255 = vadd.xlane.f32.xlu0 %v1204
        %v1256 = vpop.xlane.xlu0 %1255
        %1257 = vadd.xlane.f32.xlu0 %v1205
        %v1258 = vpop.xlane.xlu0 %1257
        %1259 = vadd.xlane.f32.xlu0 %v1206
        %v1260 = vpop.xlane.xlu0 %1259
        %1261 = vadd.xlane.f32.xlu0 %v1207
        %v1262 = vpop.xlane.xlu0 %1261
        %1263 = vadd.xlane.f32.xlu0 %v1208
        %v1264 = vpop.xlane.xlu0 %1263
        %1265 = vadd.xlane.f32.xlu0 %v1209
        %v1266 = vpop.xlane.xlu0 %1265
        %1267 = vadd.xlane.f32.xlu0 %v1210
        %v1268 = vpop.xlane.xlu0 %1267
        %1269 = vadd.xlane.f32.xlu0 %v1211
        %v1270 = vpop.xlane.xlu0 %1269
        %1271 = vadd.xlane.f32.xlu0 %v1212
        %v1272 = vpop.xlane.xlu0 %1271
        %1273 = vadd.xlane.f32.xlu0 %v1213
        %v1274 = vpop.xlane.xlu0 %1273
        %1275 = vadd.xlane.f32.xlu0 %v1214
        %v1276 = vpop.xlane.xlu0 %1275
        %1277 = vadd.xlane.f32.xlu0 %v1215
        %v1278 = vpop.xlane.xlu0 %1277
        %1279 = vadd.xlane.f32.xlu0 %v1216
        %v1280 = vpop.xlane.xlu0 %1279
        %v1281 = vmax.f32 %v1218, 1e-24
        %v1282 = vmax.f32 %v1220, 1e-24
        %v1283 = vmax.f32 %v1222, 1e-24
        %v1284 = vmax.f32 %v1224, 1e-24
        %v1285 = vmax.f32 %v1226, 1e-24
        %v1286 = vmax.f32 %v1228, 1e-24
        %v1287 = vmax.f32 %v1230, 1e-24
        %v1288 = vmax.f32 %v1232, 1e-24
        %v1289 = vmax.f32 %v1234, 1e-24
        %v1290 = vmax.f32 %v1236, 1e-24
        %v1291 = vmax.f32 %v1238, 1e-24
        %v1292 = vmax.f32 %v1240, 1e-24
        %v1293 = vmax.f32 %v1242, 1e-24
        %v1294 = vmax.f32 %v1244, 1e-24
        %v1295 = vmax.f32 %v1246, 1e-24
        %v1296 = vmax.f32 %v1248, 1e-24
        %v1297 = vmax.f32 %v1250, 1e-24
        %v1298 = vmax.f32 %v1252, 1e-24
        %v1299 = vmax.f32 %v1254, 1e-24
        %v1300 = vmax.f32 %v1256, 1e-24
        %v1301 = vmax.f32 %v1258, 1e-24
        %v1302 = vmax.f32 %v1260, 1e-24
        %v1303 = vmax.f32 %v1262, 1e-24
        %v1304 = vmax.f32 %v1264, 1e-24
        %v1305 = vmax.f32 %v1266, 1e-24
        %v1306 = vmax.f32 %v1268, 1e-24
        %v1307 = vmax.f32 %v1270, 1e-24
        %v1308 = vmax.f32 %v1272, 1e-24
        %v1309 = vmax.f32 %v1274, 1e-24
        %v1310 = vmax.f32 %v1276, 1e-24
        %v1311 = vmax.f32 %v1278, 1e-24
        %v1312 = vmax.f32 %v1280, 1e-24
        %v1313 = vrsqrt.pop %v1281
        %v1314 = vmul.f32 %v1313, %v1281
        %v1315 = vmul.f32 %v1314, %v1313
        %v1316 = vmul.f32 0.5, %v1315
        %v1317 = vsub.f32 1.5, %v1316
        %v1318 = vmul.f32 %v1313, %v1317
        %vm1319 = vweird.f32 %v1281
        %vm1320 = vweird.f32 %v1313
        %vm1321 = vmor %vm1319, %vm1320
        %v1322 = vsel %vm1321, %v1313, %v1318
        %v1323 = vrsqrt.pop %v1282
        %v1324 = vmul.f32 %v1323, %v1282
        %v1325 = vmul.f32 %v1324, %v1323
        %v1326 = vmul.f32 0.5, %v1325
        %v1327 = vsub.f32 1.5, %v1326
        %v1328 = vmul.f32 %v1323, %v1327
        %vm1329 = vweird.f32 %v1282
        %vm1330 = vweird.f32 %v1323
        %vm1331 = vmor %vm1329, %vm1330
        %v1332 = vsel %vm1331, %v1323, %v1328
        %v1333 = vrsqrt.pop %v1283
        %v1334 = vmul.f32 %v1333, %v1283
        %v1335 = vmul.f32 %v1334, %v1333
        %v1336 = vmul.f32 0.5, %v1335
        %v1337 = vsub.f32 1.5, %v1336
        %v1338 = vmul.f32 %v1333, %v1337
        %vm1339 = vweird.f32 %v1283
        %vm1340 = vweird.f32 %v1333
        %vm1341 = vmor %vm1339, %vm1340
        %v1342 = vsel %vm1341, %v1333, %v1338
        %v1343 = vrsqrt.pop %v1284
        %v1344 = vmul.f32 %v1343, %v1284
        %v1345 = vmul.f32 %v1344, %v1343
        %v1346 = vmul.f32 0.5, %v1345
        %v1347 = vsub.f32 1.5, %v1346
        %v1348 = vmul.f32 %v1343, %v1347
        %vm1349 = vweird.f32 %v1284
        %vm1350 = vweird.f32 %v1343
        %vm1351 = vmor %vm1349, %vm1350
        %v1352 = vsel %vm1351, %v1343, %v1348
        %v1353 = vrsqrt.pop %v1285
        %v1354 = vmul.f32 %v1353, %v1285
        %v1355 = vmul.f32 %v1354, %v1353
        %v1356 = vmul.f32 0.5, %v1355
        %v1357 = vsub.f32 1.5, %v1356
        %v1358 = vmul.f32 %v1353, %v1357
        %vm1359 = vweird.f32 %v1285
        %vm1360 = vweird.f32 %v1353
        %vm1361 = vmor %vm1359, %vm1360
        %v1362 = vsel %vm1361, %v1353, %v1358
        %v1363 = vrsqrt.pop %v1286
        %v1364 = vmul.f32 %v1363, %v1286
        %v1365 = vmul.f32 %v1364, %v1363
        %v1366 = vmul.f32 0.5, %v1365
        %v1367 = vsub.f32 1.5, %v1366
        %v1368 = vmul.f32 %v1363, %v1367
        %vm1369 = vweird.f32 %v1286
        %vm1370 = vweird.f32 %v1363
        %vm1371 = vmor %vm1369, %vm1370
        %v1372 = vsel %vm1371, %v1363, %v1368
        %v1373 = vrsqrt.pop %v1287
        %v1374 = vmul.f32 %v1373, %v1287
        %v1375 = vmul.f32 %v1374, %v1373
        %v1376 = vmul.f32 0.5, %v1375
        %v1377 = vsub.f32 1.5, %v1376
        %v1378 = vmul.f32 %v1373, %v1377
        %vm1379 = vweird.f32 %v1287
        %vm1380 = vweird.f32 %v1373
        %vm1381 = vmor %vm1379, %vm1380
        %v1382 = vsel %vm1381, %v1373, %v1378
        %v1383 = vrsqrt.pop %v1288
        %v1384 = vmul.f32 %v1383, %v1288
        %v1385 = vmul.f32 %v1384, %v1383
        %v1386 = vmul.f32 0.5, %v1385
        %v1387 = vsub.f32 1.5, %v1386
        %v1388 = vmul.f32 %v1383, %v1387
        %vm1389 = vweird.f32 %v1288
        %vm1390 = vweird.f32 %v1383
        %vm1391 = vmor %vm1389, %vm1390
        %v1392 = vsel %vm1391, %v1383, %v1388
        %v1393 = vrsqrt.pop %v1289
        %v1394 = vmul.f32 %v1393, %v1289
        %v1395 = vmul.f32 %v1394, %v1393
        %v1396 = vmul.f32 0.5, %v1395
        %v1397 = vsub.f32 1.5, %v1396
        %v1398 = vmul.f32 %v1393, %v1397
        %vm1399 = vweird.f32 %v1289
        %vm1400 = vweird.f32 %v1393
        %vm1401 = vmor %vm1399, %vm1400
        %v1402 = vsel %vm1401, %v1393, %v1398
        %v1403 = vrsqrt.pop %v1290
        %v1404 = vmul.f32 %v1403, %v1290
        %v1405 = vmul.f32 %v1404, %v1403
        %v1406 = vmul.f32 0.5, %v1405
        %v1407 = vsub.f32 1.5, %v1406
        %v1408 = vmul.f32 %v1403, %v1407
        %vm1409 = vweird.f32 %v1290
        %vm1410 = vweird.f32 %v1403
        %vm1411 = vmor %vm1409, %vm1410
        %v1412 = vsel %vm1411, %v1403, %v1408
        %v1413 = vrsqrt.pop %v1291
        %v1414 = vmul.f32 %v1413, %v1291
        %v1415 = vmul.f32 %v1414, %v1413
        %v1416 = vmul.f32 0.5, %v1415
        %v1417 = vsub.f32 1.5, %v1416
        %v1418 = vmul.f32 %v1413, %v1417
        %vm1419 = vweird.f32 %v1291
        %vm1420 = vweird.f32 %v1413
        %vm1421 = vmor %vm1419, %vm1420
        %v1422 = vsel %vm1421, %v1413, %v1418
        %v1423 = vrsqrt.pop %v1292
        %v1424 = vmul.f32 %v1423, %v1292
        %v1425 = vmul.f32 %v1424, %v1423
        %v1426 = vmul.f32 0.5, %v1425
        %v1427 = vsub.f32 1.5, %v1426
        %v1428 = vmul.f32 %v1423, %v1427
        %vm1429 = vweird.f32 %v1292
        %vm1430 = vweird.f32 %v1423
        %vm1431 = vmor %vm1429, %vm1430
        %v1432 = vsel %vm1431, %v1423, %v1428
        %v1433 = vrsqrt.pop %v1293
        %v1434 = vmul.f32 %v1433, %v1293
        %v1435 = vmul.f32 %v1434, %v1433
        %v1436 = vmul.f32 0.5, %v1435
        %v1437 = vsub.f32 1.5, %v1436
        %v1438 = vmul.f32 %v1433, %v1437
        %vm1439 = vweird.f32 %v1293
        %vm1440 = vweird.f32 %v1433
        %vm1441 = vmor %vm1439, %vm1440
        %v1442 = vsel %vm1441, %v1433, %v1438
        %v1443 = vrsqrt.pop %v1294
        %v1444 = vmul.f32 %v1443, %v1294
        %v1445 = vmul.f32 %v1444, %v1443
        %v1446 = vmul.f32 0.5, %v1445
        %v1447 = vsub.f32 1.5, %v1446
        %v1448 = vmul.f32 %v1443, %v1447
        %vm1449 = vweird.f32 %v1294
        %vm1450 = vweird.f32 %v1443
        %vm1451 = vmor %vm1449, %vm1450
        %v1452 = vsel %vm1451, %v1443, %v1448
        %v1453 = vrsqrt.pop %v1295
        %v1454 = vmul.f32 %v1453, %v1295
        %v1455 = vmul.f32 %v1454, %v1453
        %v1456 = vmul.f32 0.5, %v1455
        %v1457 = vsub.f32 1.5, %v1456
        %v1458 = vmul.f32 %v1453, %v1457
        %vm1459 = vweird.f32 %v1295
        %vm1460 = vweird.f32 %v1453
        %vm1461 = vmor %vm1459, %vm1460
        %v1462 = vsel %vm1461, %v1453, %v1458
        %v1463 = vrsqrt.pop %v1296
        %v1464 = vmul.f32 %v1463, %v1296
        %v1465 = vmul.f32 %v1464, %v1463
        %v1466 = vmul.f32 0.5, %v1465
        %v1467 = vsub.f32 1.5, %v1466
        %v1468 = vmul.f32 %v1463, %v1467
        %vm1469 = vweird.f32 %v1296
        %vm1470 = vweird.f32 %v1463
        %vm1471 = vmor %vm1469, %vm1470
        %v1472 = vsel %vm1471, %v1463, %v1468
        %v1473 = vrsqrt.pop %v1297
        %v1474 = vmul.f32 %v1473, %v1297
        %v1475 = vmul.f32 %v1474, %v1473
        %v1476 = vmul.f32 0.5, %v1475
        %v1477 = vsub.f32 1.5, %v1476
        %v1478 = vmul.f32 %v1473, %v1477
        %vm1479 = vweird.f32 %v1297
        %vm1480 = vweird.f32 %v1473
        %vm1481 = vmor %vm1479, %vm1480
        %v1482 = vsel %vm1481, %v1473, %v1478
        %v1483 = vrsqrt.pop %v1298
        %v1484 = vmul.f32 %v1483, %v1298
        %v1485 = vmul.f32 %v1484, %v1483
        %v1486 = vmul.f32 0.5, %v1485
        %v1487 = vsub.f32 1.5, %v1486
        %v1488 = vmul.f32 %v1483, %v1487
        %vm1489 = vweird.f32 %v1298
        %vm1490 = vweird.f32 %v1483
        %vm1491 = vmor %vm1489, %vm1490
        %v1492 = vsel %vm1491, %v1483, %v1488
        %v1493 = vrsqrt.pop %v1299
        %v1494 = vmul.f32 %v1493, %v1299
        %v1495 = vmul.f32 %v1494, %v1493
        %v1496 = vmul.f32 0.5, %v1495
        %v1497 = vsub.f32 1.5, %v1496
        %v1498 = vmul.f32 %v1493, %v1497
        %vm1499 = vweird.f32 %v1299
        %vm1500 = vweird.f32 %v1493
        %vm1501 = vmor %vm1499, %vm1500
        %v1502 = vsel %vm1501, %v1493, %v1498
        %v1503 = vrsqrt.pop %v1300
        %v1504 = vmul.f32 %v1503, %v1300
        %v1505 = vmul.f32 %v1504, %v1503
        %v1506 = vmul.f32 0.5, %v1505
        %v1507 = vsub.f32 1.5, %v1506
        %v1508 = vmul.f32 %v1503, %v1507
        %vm1509 = vweird.f32 %v1300
        %vm1510 = vweird.f32 %v1503
        %vm1511 = vmor %vm1509, %vm1510
        %v1512 = vsel %vm1511, %v1503, %v1508
        %v1513 = vrsqrt.pop %v1301
        %v1514 = vmul.f32 %v1513, %v1301
        %v1515 = vmul.f32 %v1514, %v1513
        %v1516 = vmul.f32 0.5, %v1515
        %v1517 = vsub.f32 1.5, %v1516
        %v1518 = vmul.f32 %v1513, %v1517
        %vm1519 = vweird.f32 %v1301
        %vm1520 = vweird.f32 %v1513
        %vm1521 = vmor %vm1519, %vm1520
        %v1522 = vsel %vm1521, %v1513, %v1518
        %v1523 = vrsqrt.pop %v1302
        %v1524 = vmul.f32 %v1523, %v1302
        %v1525 = vmul.f32 %v1524, %v1523
        %v1526 = vmul.f32 0.5, %v1525
        %v1527 = vsub.f32 1.5, %v1526
        %v1528 = vmul.f32 %v1523, %v1527
        %vm1529 = vweird.f32 %v1302
        %vm1530 = vweird.f32 %v1523
        %vm1531 = vmor %vm1529, %vm1530
        %v1532 = vsel %vm1531, %v1523, %v1528
        %v1533 = vrsqrt.pop %v1303
        %v1534 = vmul.f32 %v1533, %v1303
        %v1535 = vmul.f32 %v1534, %v1533
        %v1536 = vmul.f32 0.5, %v1535
        %v1537 = vsub.f32 1.5, %v1536
        %v1538 = vmul.f32 %v1533, %v1537
        %vm1539 = vweird.f32 %v1303
        %vm1540 = vweird.f32 %v1533
        %vm1541 = vmor %vm1539, %vm1540
        %v1542 = vsel %vm1541, %v1533, %v1538
        %v1543 = vrsqrt.pop %v1304
        %v1544 = vmul.f32 %v1543, %v1304
        %v1545 = vmul.f32 %v1544, %v1543
        %v1546 = vmul.f32 0.5, %v1545
        %v1547 = vsub.f32 1.5, %v1546
        %v1548 = vmul.f32 %v1543, %v1547
        %vm1549 = vweird.f32 %v1304
        %vm1550 = vweird.f32 %v1543
        %vm1551 = vmor %vm1549, %vm1550
        %v1552 = vsel %vm1551, %v1543, %v1548
        %v1553 = vrsqrt.pop %v1305
        %v1554 = vmul.f32 %v1553, %v1305
        %v1555 = vmul.f32 %v1554, %v1553
        %v1556 = vmul.f32 0.5, %v1555
        %v1557 = vsub.f32 1.5, %v1556
        %v1558 = vmul.f32 %v1553, %v1557
        %vm1559 = vweird.f32 %v1305
        %vm1560 = vweird.f32 %v1553
        %vm1561 = vmor %vm1559, %vm1560
        %v1562 = vsel %vm1561, %v1553, %v1558
        %v1563 = vrsqrt.pop %v1306
        %v1564 = vmul.f32 %v1563, %v1306
        %v1565 = vmul.f32 %v1564, %v1563
        %v1566 = vmul.f32 0.5, %v1565
        %v1567 = vsub.f32 1.5, %v1566
        %v1568 = vmul.f32 %v1563, %v1567
        %vm1569 = vweird.f32 %v1306
        %vm1570 = vweird.f32 %v1563
        %vm1571 = vmor %vm1569, %vm1570
        %v1572 = vsel %vm1571, %v1563, %v1568
        %v1573 = vrsqrt.pop %v1307
        %v1574 = vmul.f32 %v1573, %v1307
        %v1575 = vmul.f32 %v1574, %v1573
        %v1576 = vmul.f32 0.5, %v1575
        %v1577 = vsub.f32 1.5, %v1576
        %v1578 = vmul.f32 %v1573, %v1577
        %vm1579 = vweird.f32 %v1307
        %vm1580 = vweird.f32 %v1573
        %vm1581 = vmor %vm1579, %vm1580
        %v1582 = vsel %vm1581, %v1573, %v1578
        %v1583 = vrsqrt.pop %v1308
        %v1584 = vmul.f32 %v1583, %v1308
        %v1585 = vmul.f32 %v1584, %v1583
        %v1586 = vmul.f32 0.5, %v1585
        %v1587 = vsub.f32 1.5, %v1586
        %v1588 = vmul.f32 %v1583, %v1587
        %vm1589 = vweird.f32 %v1308
        %vm1590 = vweird.f32 %v1583
        %vm1591 = vmor %vm1589, %vm1590
        %v1592 = vsel %vm1591, %v1583, %v1588
        %v1593 = vrsqrt.pop %v1309
        %v1594 = vmul.f32 %v1593, %v1309
        %v1595 = vmul.f32 %v1594, %v1593
        %v1596 = vmul.f32 0.5, %v1595
        %v1597 = vsub.f32 1.5, %v1596
        %v1598 = vmul.f32 %v1593, %v1597
        %vm1599 = vweird.f32 %v1309
        %vm1600 = vweird.f32 %v1593
        %vm1601 = vmor %vm1599, %vm1600
        %v1602 = vsel %vm1601, %v1593, %v1598
        %v1603 = vrsqrt.pop %v1310
        %v1604 = vmul.f32 %v1603, %v1310
        %v1605 = vmul.f32 %v1604, %v1603
        %v1606 = vmul.f32 0.5, %v1605
        %v1607 = vsub.f32 1.5, %v1606
        %v1608 = vmul.f32 %v1603, %v1607
        %vm1609 = vweird.f32 %v1310
        %vm1610 = vweird.f32 %v1603
        %vm1611 = vmor %vm1609, %vm1610
        %v1612 = vsel %vm1611, %v1603, %v1608
        %v1613 = vrsqrt.pop %v1311
        %v1614 = vmul.f32 %v1613, %v1311
        %v1615 = vmul.f32 %v1614, %v1613
        %v1616 = vmul.f32 0.5, %v1615
        %v1617 = vsub.f32 1.5, %v1616
        %v1618 = vmul.f32 %v1613, %v1617
        %vm1619 = vweird.f32 %v1311
        %vm1620 = vweird.f32 %v1613
        %vm1621 = vmor %vm1619, %vm1620
        %v1622 = vsel %vm1621, %v1613, %v1618
        %v1623 = vrsqrt.pop %v1312
        %v1624 = vmul.f32 %v1623, %v1312
        %v1625 = vmul.f32 %v1624, %v1623
        %v1626 = vmul.f32 0.5, %v1625
        %v1627 = vsub.f32 1.5, %v1626
        %v1628 = vmul.f32 %v1623, %v1627
        %vm1629 = vweird.f32 %v1312
        %vm1630 = vweird.f32 %v1623
        %vm1631 = vmor %vm1629, %vm1630
        %v1632 = vsel %vm1631, %v1623, %v1628
        %v1633 = vmul.f32 %v1322, 3.1622777
        %v1634 = vmul.f32 %v1332, 3.1622777
        %v1635 = vmul.f32 %v1342, 3.1622777
        %v1636 = vmul.f32 %v1352, 3.1622777
        %v1637 = vmul.f32 %v1362, 3.1622777
        %v1638 = vmul.f32 %v1372, 3.1622777
        %v1639 = vmul.f32 %v1382, 3.1622777
        %v1640 = vmul.f32 %v1392, 3.1622777
        %v1641 = vmul.f32 %v1402, 3.1622777
        %v1642 = vmul.f32 %v1412, 3.1622777
        %v1643 = vmul.f32 %v1422, 3.1622777
        %v1644 = vmul.f32 %v1432, 3.1622777
        %v1645 = vmul.f32 %v1442, 3.1622777
        %v1646 = vmul.f32 %v1452, 3.1622777
        %v1647 = vmul.f32 %v1462, 3.1622777
        %v1648 = vmul.f32 %v1472, 3.1622777
        %v1649 = vmul.f32 %v1482, 3.1622777
        %v1650 = vmul.f32 %v1492, 3.1622777
        %v1651 = vmul.f32 %v1502, 3.1622777
        %v1652 = vmul.f32 %v1512, 3.1622777
        %v1653 = vmul.f32 %v1522, 3.1622777
        %v1654 = vmul.f32 %v1532, 3.1622777
        %v1655 = vmul.f32 %v1542, 3.1622777
        %v1656 = vmul.f32 %v1552, 3.1622777
        %v1657 = vmul.f32 %v1562, 3.1622777
        %v1658 = vmul.f32 %v1572, 3.1622777
        %v1659 = vmul.f32 %v1582, 3.1622777
        %v1660 = vmul.f32 %v1592, 3.1622777
        %v1661 = vmul.f32 %v1602, 3.1622777
        %v1662 = vmul.f32 %v1612, 3.1622777
        %v1663 = vmul.f32 %v1622, 3.1622777
        %v1664 = vmul.f32 %v1632, 3.1622777
        %v1665 = vmul.f32 %v1153, %v1633
        %v1666 = vmul.f32 %v1154, %v1634
        %v1667 = vmul.f32 %v1155, %v1635
        %v1668 = vmul.f32 %v1156, %v1636
        %v1669 = vmul.f32 %v1157, %v1637
        %v1670 = vmul.f32 %v1158, %v1638
        %v1671 = vmul.f32 %v1159, %v1639
        %v1672 = vmul.f32 %v1160, %v1640
        %v1673 = vmul.f32 %v1161, %v1641
        %v1674 = vmul.f32 %v1162, %v1642
        %v1675 = vmul.f32 %v1163, %v1643
        %v1676 = vmul.f32 %v1164, %v1644
        %v1677 = vmul.f32 %v1165, %v1645
        %v1678 = vmul.f32 %v1166, %v1646
        %v1679 = vmul.f32 %v1167, %v1647
        %v1680 = vmul.f32 %v1168, %v1648
        %v1681 = vmul.f32 %v1169, %v1649
        %v1682 = vmul.f32 %v1170, %v1650
        %v1683 = vmul.f32 %v1171, %v1651
        %v1684 = vmul.f32 %v1172, %v1652
        %v1685 = vmul.f32 %v1173, %v1653
        %v1686 = vmul.f32 %v1174, %v1654
        %v1687 = vmul.f32 %v1175, %v1655
        %v1688 = vmul.f32 %v1176, %v1656
        %v1689 = vmul.f32 %v1177, %v1657
        %v1690 = vmul.f32 %v1178, %v1658
        %v1691 = vmul.f32 %v1179, %v1659
        %v1692 = vmul.f32 %v1180, %v1660
        %v1693 = vmul.f32 %v1181, %v1661
        %v1694 = vmul.f32 %v1182, %v1662
        %v1695 = vmul.f32 %v1183, %v1663
        %v1696 = vmul.f32 %v1184, %v1664
        %v1697 = vpack.c.bf16 %v1665, %v1665
        %v1698 = vpack.c.bf16 %v1666, %v1666
        %v1699 = vpack.c.bf16 %v1667, %v1667
        %v1700 = vpack.c.bf16 %v1668, %v1668
        %v1701 = vpack.c.bf16 %v1669, %v1669
        %v1702 = vpack.c.bf16 %v1670, %v1670
        %v1703 = vpack.c.bf16 %v1671, %v1671
        %v1704 = vpack.c.bf16 %v1672, %v1672
        %v1705 = vpack.c.bf16 %v1673, %v1673
        %v1706 = vpack.c.bf16 %v1674, %v1674
        %v1707 = vpack.c.bf16 %v1675, %v1675
        %v1708 = vpack.c.bf16 %v1676, %v1676
        %v1709 = vpack.c.bf16 %v1677, %v1677
        %v1710 = vpack.c.bf16 %v1678, %v1678
        %v1711 = vpack.c.bf16 %v1679, %v1679
        %v1712 = vpack.c.bf16 %v1680, %v1680
        %v1713 = vpack.c.bf16 %v1681, %v1681
        %v1714 = vpack.c.bf16 %v1682, %v1682
        %v1715 = vpack.c.bf16 %v1683, %v1683
        %v1716 = vpack.c.bf16 %v1684, %v1684
        %v1717 = vpack.c.bf16 %v1685, %v1685
        %v1718 = vpack.c.bf16 %v1686, %v1686
        %v1719 = vpack.c.bf16 %v1687, %v1687
        %v1720 = vpack.c.bf16 %v1688, %v1688
        %v1721 = vpack.c.bf16 %v1689, %v1689
        %v1722 = vpack.c.bf16 %v1690, %v1690
        %v1723 = vpack.c.bf16 %v1691, %v1691
        %v1724 = vpack.c.bf16 %v1692, %v1692
        %v1725 = vpack.c.bf16 %v1693, %v1693
        %v1726 = vpack.c.bf16 %v1694, %v1694
        %v1727 = vpack.c.bf16 %v1695, %v1695
        %v1728 = vpack.c.bf16 %v1696, %v1696
        %1729 = vst [vmem:[%s300] sm:$0xf] %v1697
        %1730 = vst [vmem:[%s300 + $0x4] sm:$0xf] %v1698
        %1731 = vst [vmem:[%s300 + $0x8] sm:$0xf] %v1699
        %1732 = vst [vmem:[%s300 + $0xc] sm:$0xf] %v1700
        %1733 = vst [vmem:[%s300 + $0x10] sm:$0xf] %v1701
        %1734 = vst [vmem:[%s300 + $0x14] sm:$0xf] %v1702
        %1735 = vst [vmem:[%s300 + $0x18] sm:$0xf] %v1703
        %1736 = vst [vmem:[%s300 + $0x1c] sm:$0xf] %v1704
        %1737 = vst [vmem:[%s300 + $0x20] sm:$0xf] %v1705
        %1738 = vst [vmem:[%s300 + $0x24] sm:$0xf] %v1706
        %1739 = vst [vmem:[%s300 + $0x28] sm:$0xf] %v1707
        %1740 = vst [vmem:[%s300 + $0x2c] sm:$0xf] %v1708
        %1741 = vst [vmem:[%s300 + $0x30] sm:$0xf] %v1709
        %1742 = vst [vmem:[%s300 + $0x34] sm:$0xf] %v1710
        %1743 = vst [vmem:[%s300 + $0x38] sm:$0xf] %v1711
        %1744 = vst [vmem:[%s300 + $0x3c] sm:$0xf] %v1712
        %1745 = vst [vmem:[%s300 + $0x40] sm:$0xf] %v1713
        %1746 = vst [vmem:[%s300 + $0x44] sm:$0xf] %v1714
        %1747 = vst [vmem:[%s300 + $0x48] sm:$0xf] %v1715
        %1748 = vst [vmem:[%s300 + $0x4c] sm:$0xf] %v1716
        %1749 = vst [vmem:[%s300 + $0x50] sm:$0xf] %v1717
        %1750 = vst [vmem:[%s300 + $0x54] sm:$0xf] %v1718
        %1751 = vst [vmem:[%s300 + $0x58] sm:$0xf] %v1719
        %1752 = vst [vmem:[%s300 + $0x5c] sm:$0xf] %v1720
        %1753 = vst [vmem:[%s300 + $0x60] sm:$0xf] %v1721
        %1754 = vst [vmem:[%s300 + $0x64] sm:$0xf] %v1722
        %1755 = vst [vmem:[%s300 + $0x68] sm:$0xf] %v1723
        %1756 = vst [vmem:[%s300 + $0x6c] sm:$0xf] %v1724
        %1757 = vst [vmem:[%s300 + $0x70] sm:$0xf] %v1725
        %1758 = vst [vmem:[%s300 + $0x74] sm:$0xf] %v1726
        %1759 = vst [vmem:[%s300 + $0x78] sm:$0xf] %v1727
        %1760 = vst [vmem:[%s300 + $0x7c] sm:$0xf] %v1728
        %v1793 = vunpack.c.l.b16 %v1697
        %v1794 = vunpack.c.l.b16 %v1698
        %v1795 = vunpack.c.l.b16 %v1699
        %v1796 = vunpack.c.l.b16 %v1700
        %v1797 = vunpack.c.l.b16 %v1701
        %v1798 = vunpack.c.l.b16 %v1702
        %v1799 = vunpack.c.l.b16 %v1703
        %v1800 = vunpack.c.l.b16 %v1704
        %v1801 = vunpack.c.l.b16 %v1705
        %v1802 = vunpack.c.l.b16 %v1706
        %v1803 = vunpack.c.l.b16 %v1707
        %v1804 = vunpack.c.l.b16 %v1708
        %v1805 = vunpack.c.l.b16 %v1709
        %v1806 = vunpack.c.l.b16 %v1710
        %v1807 = vunpack.c.l.b16 %v1711
        %v1808 = vunpack.c.l.b16 %v1712
        %v1809 = vunpack.c.l.b16 %v1713
        %v1810 = vunpack.c.l.b16 %v1714
        %v1811 = vunpack.c.l.b16 %v1715
        %v1812 = vunpack.c.l.b16 %v1716
        %v1813 = vunpack.c.l.b16 %v1717
        %v1814 = vunpack.c.l.b16 %v1718
        %v1815 = vunpack.c.l.b16 %v1719
        %v1816 = vunpack.c.l.b16 %v1720
        %v1817 = vunpack.c.l.b16 %v1721
        %v1818 = vunpack.c.l.b16 %v1722
        %v1819 = vunpack.c.l.b16 %v1723
        %v1820 = vunpack.c.l.b16 %v1724
        %v1821 = vunpack.c.l.b16 %v1725
        %v1822 = vunpack.c.l.b16 %v1726
        %v1823 = vunpack.c.l.b16 %v1727
        %v1824 = vunpack.c.l.b16 %v1728
        %v1825 = vpack.c.b16 %v1794, %v1793
        %v1826 = vpack.c.b16 %v1796, %v1795
        %v1827 = vpack.c.b16 %v1798, %v1797
        %v1828 = vpack.c.b16 %v1800, %v1799
        %v1829 = vpack.c.b16 %v1802, %v1801
        %v1830 = vpack.c.b16 %v1804, %v1803
        %v1831 = vpack.c.b16 %v1806, %v1805
        %v1832 = vpack.c.b16 %v1808, %v1807
        %v1833 = vpack.c.b16 %v1810, %v1809
        %v1834 = vpack.c.b16 %v1812, %v1811
        %v1835 = vpack.c.b16 %v1814, %v1813
        %v1836 = vpack.c.b16 %v1816, %v1815
        %v1837 = vpack.c.b16 %v1818, %v1817
        %v1838 = vpack.c.b16 %v1820, %v1819
        %v1839 = vpack.c.b16 %v1822, %v1821
        %v1840 = vpack.c.b16 %v1824, %v1823
        %1857 = vxpose.xlu0.c.b16.start [1/8] %v1825, 128
        %1858 = vxpose.xlu0.c.b16.cont [2/8] %v1826, 128
        %1859 = vxpose.xlu0.c.b16.cont [3/8] %v1827, 128
        %1860 = vxpose.xlu0.c.b16.cont [4/8] %v1828, 128
        %1861 = vxpose.xlu0.c.b16.cont [5/8] %v1829, 128
        %1862 = vxpose.xlu0.c.b16.cont [6/8] %v1830, 128
        %1863 = vxpose.xlu0.c.b16.cont [7/8] %v1831, 128
        %1864 = vxpose.xlu0.c.b16.end [8/8] %v1832, 128
        %v1865 = vpop.trf.xlu0
        %v1866 = vpop.trf.xlu0
        %v1867 = vpop.trf.xlu0
        %v1868 = vpop.trf.xlu0
        %v1869 = vpop.trf.xlu0
        %v1870 = vpop.trf.xlu0
        %v1871 = vpop.trf.xlu0
        %v1872 = vpop.trf.xlu0
        %1873 = vxpose.xlu0.c.b16.start [1/8] %v1833, 128
        %1874 = vxpose.xlu0.c.b16.cont [2/8] %v1834, 128
        %1875 = vxpose.xlu0.c.b16.cont [3/8] %v1835, 128
        %1876 = vxpose.xlu0.c.b16.cont [4/8] %v1836, 128
        %1877 = vxpose.xlu0.c.b16.cont [5/8] %v1837, 128
        %1878 = vxpose.xlu0.c.b16.cont [6/8] %v1838, 128
        %1879 = vxpose.xlu0.c.b16.cont [7/8] %v1839, 128
        %1880 = vxpose.xlu0.c.b16.end [8/8] %v1840, 128
        %v1881 = vpop.trf.xlu0
        %v1882 = vpop.trf.xlu0
        %v1883 = vpop.trf.xlu0
        %v1884 = vpop.trf.xlu0
        %v1885 = vpop.trf.xlu0
        %v1886 = vpop.trf.xlu0
        %v1887 = vpop.trf.xlu0
        %v1888 = vpop.trf.xlu0
        %v1905 = vunpack.c.l.b16 %v1865
        %v1906 = vunpack.c.l.b16 %v1881
        %v1907 = vunpack.c.h.b16 %v1865
        %v1908 = vunpack.c.h.b16 %v1881
        %v1909 = vunpack.c.l.b16 %v1866
        %v1910 = vunpack.c.l.b16 %v1882
        %v1911 = vunpack.c.h.b16 %v1866
        %v1912 = vunpack.c.h.b16 %v1882
        %v1913 = vunpack.c.l.b16 %v1867
        %v1914 = vunpack.c.l.b16 %v1883
        %v1915 = vunpack.c.h.b16 %v1867
        %v1916 = vunpack.c.h.b16 %v1883
        %v1917 = vunpack.c.l.b16 %v1868
        %v1918 = vunpack.c.l.b16 %v1884
        %v1919 = vunpack.c.h.b16 %v1868
        %v1920 = vunpack.c.h.b16 %v1884
        %v1921 = vunpack.c.l.b16 %v1869
        %v1922 = vunpack.c.l.b16 %v1885
        %v1923 = vunpack.c.h.b16 %v1869
        %v1924 = vunpack.c.h.b16 %v1885
        %v1925 = vunpack.c.l.b16 %v1870
        %v1926 = vunpack.c.l.b16 %v1886
        %v1927 = vunpack.c.h.b16 %v1870
        %v1928 = vunpack.c.h.b16 %v1886
        %v1929 = vunpack.c.l.b16 %v1871
        %v1930 = vunpack.c.l.b16 %v1887
        %v1931 = vunpack.c.h.b16 %v1871
        %v1932 = vunpack.c.h.b16 %v1887
        %v1933 = vunpack.c.l.b16 %v1872
        %v1934 = vunpack.c.l.b16 %v1888
        %v1935 = vunpack.c.h.b16 %v1872
        %v1936 = vunpack.c.h.b16 %v1888
        %v1937 = vpack.c.b16 %v1906, %v1905
        %v1938 = vpack.c.b16 %v1908, %v1907
        %v1939 = vpack.c.b16 %v1910, %v1909
        %v1940 = vpack.c.b16 %v1912, %v1911
        %v1941 = vpack.c.b16 %v1914, %v1913
        %v1942 = vpack.c.b16 %v1916, %v1915
        %v1943 = vpack.c.b16 %v1918, %v1917
        %v1944 = vpack.c.b16 %v1920, %v1919
        %v1945 = vpack.c.b16 %v1922, %v1921
        %v1946 = vpack.c.b16 %v1924, %v1923
        %v1947 = vpack.c.b16 %v1926, %v1925
        %v1948 = vpack.c.b16 %v1928, %v1927
        %v1949 = vpack.c.b16 %v1930, %v1929
        %v1950 = vpack.c.b16 %v1932, %v1931
        %v1951 = vpack.c.b16 %v1934, %v1933
        %v1952 = vpack.c.b16 %v1936, %v1935
        %1969 = vst [vmem:[%s314] sm:$0xff] %v1937
        %1970 = vst [vmem:[%s314 + $0x8] sm:$0xff] %v1938
        %1971 = vst [vmem:[%s314 + $0x10] sm:$0xff] %v1939
        %1972 = vst [vmem:[%s314 + $0x18] sm:$0xff] %v1940
        %1973 = vst [vmem:[%s314 + $0x20] sm:$0xff] %v1941
        %1974 = vst [vmem:[%s314 + $0x28] sm:$0xff] %v1942
        %1975 = vst [vmem:[%s314 + $0x30] sm:$0xff] %v1943
        %1976 = vst [vmem:[%s314 + $0x38] sm:$0xff] %v1944
        %1977 = vst [vmem:[%s314 + $0x40] sm:$0xff] %v1945
        %1978 = vst [vmem:[%s314 + $0x48] sm:$0xff] %v1946
        %1979 = vst [vmem:[%s314 + $0x50] sm:$0xff] %v1947
        %1980 = vst [vmem:[%s314 + $0x58] sm:$0xff] %v1948
        %1981 = vst [vmem:[%s314 + $0x60] sm:$0xff] %v1949
        %1982 = vst [vmem:[%s314 + $0x68] sm:$0xff] %v1950
        %1983 = vst [vmem:[%s314 + $0x70] sm:$0xff] %v1951
        %1984 = vst [vmem:[%s314 + $0x78] sm:$0xff] %v1952
        %s1985 = sand.u32 %s92, 1
        %s1986 = scalar_lea.sflag [#allocation4], %s1985
        %s1987 = sand.u32 %s92, 1
        %s1988 = smul.addr %s1987, 128
        %s1989 = scalar_lea.vmem [#allocation7], %s1988
        %s1990 = sand.u32 %s32, 1
        %s1991 = scalar_lea.sflag [#allocation9], %s1990
        %s1992 = sand.u32 %s118, 1
        %s1993 = smul.addr %s1992, 128
        %s1994 = scalar_lea.vmem [#allocation8], %s1993
        %s1995 = sand.u32 %s32, 1
        %s1996 = scalar_lea.sflag [#allocation9], %s1995
        %s1997 = sand.u32 %s144, 1
        %s1998 = smul.addr %s1997, 128
        %s1999 = scalar_lea.vmem [#allocation10], %s1998
        %s2000 = sand.u32 %s170, 1
        %s2001 = scalar_lea.sflag [#allocation12], %s2000
        %s2002 = sand.u32 %s170, 1
        %s2003 = smul.addr %s2002, 128
        %s2004 = scalar_lea.vmem [#allocation11], %s2003
        // Predicated region
        $region37: #{tpu_custom_call.1} parent=27 // pred_check
          %p2005 = pneg %p102
        $region38: #{tpu_custom_call.1} parent=27 // pred_check_branch
          %2007 = sbr.rel (%p2005) target = $region40
        $region39: #{tpu_custom_call.1} parent=27 // pred_region
          %s2008 = smul.u32 32, %s32
          %2010 = vsyncadd %s1986, 0
          %s2011 = smul.addr %s2008, 4
          %s2012 = scalar_lea.hbm %s2, %s2011
          %s2013 = sshll.u32 %s1989, 4
          %s2014 = int_to_ptr.vmem [resolvable:$true] %s2013
          %s2015 = sshll.u32 %s2012, 4
          %s2016 = int_to_ptr.hbm [resolvable:$true] %s2015
          %2021 = dma.vmem_to_hbm [thread:$0]  %s2014, 2048, %s2016, %s1986, 64, 64, 4
        $region40: #{tpu_custom_call.1} parent=27 // pred_fallthru
          _
        // Predicated region
        $region41: #{tpu_custom_call.1} parent=27 // pred_check
          %p2022 = pneg %p128
        $region42: #{tpu_custom_call.1} parent=27 // pred_check_branch
          %2024 = sbr.rel (%p2022) target = $region44
        $region43: #{tpu_custom_call.1} parent=27 // pred_region
          %s2025 = smul.u32 32, %s32
          %2027 = vsyncadd %s1991, 0
          %s2028 = smul.addr %s2025, 4
          %s2029 = scalar_lea.hbm %s3, %s2028
          %s2030 = sshll.u32 %s1994, 4
          %s2031 = int_to_ptr.vmem [resolvable:$true] %s2030
          %s2032 = sshll.u32 %s2029, 4
          %s2033 = int_to_ptr.hbm [resolvable:$true] %s2032
          %2038 = dma.vmem_to_hbm [thread:$0]  %s2031, 2048, %s2033, %s1991, 64, 64, 4
        $region44: #{tpu_custom_call.1} parent=27 // pred_fallthru
          _
        // Predicated region
        $region45: #{tpu_custom_call.1} parent=27 // pred_check
          %p2039 = pneg %p154
        $region46: #{tpu_custom_call.1} parent=27 // pred_check_branch
          %2041 = sbr.rel (%p2039) target = $region48
        $region47: #{tpu_custom_call.1} parent=27 // pred_region
          %s2042 = smul.u32 2, %s32
          %2044 = vsyncadd %s1996, 0
          %s2045 = smul.addr %s2042, 4
          %s2046 = scalar_lea.hbm %s4, %s2045
          %s2047 = sshll.u32 %s1999, 4
          %s2048 = int_to_ptr.vmem [resolvable:$true] %s2047
          %s2049 = sshll.u32 %s2046, 4
          %s2050 = int_to_ptr.hbm [resolvable:$true] %s2049
          %2055 = dma.vmem_to_hbm [thread:$0]  %s2048, 2048, %s2050, %s1996, 128, 256, 8
        $region48: #{tpu_custom_call.1} parent=27 // pred_fallthru
          _
        // Predicated region
        $region49: #{tpu_custom_call.1} parent=27 // pred_check
          %p2056 = pneg %p180
        $region50: #{tpu_custom_call.1} parent=27 // pred_check_branch
          %2058 = sbr.rel (%p2056) target = $region52
        $region51: #{tpu_custom_call.1} parent=27 // pred_region
          %s2059 = smul.u32 2, %s32
          %2061 = vsyncadd %s2001, 0
          %s2062 = smul.addr %s2059, 4
          %s2063 = scalar_lea.hbm %s5, %s2062
          %s2064 = sshll.u32 %s2004, 4
          %s2065 = int_to_ptr.vmem [resolvable:$true] %s2064
          %s2066 = sshll.u32 %s2063, 4
          %s2067 = int_to_ptr.hbm [resolvable:$true] %s2066
          %2072 = dma.vmem_to_hbm [thread:$0]  %s2065, 2048, %s2067, %s2001, 128, 256, 8
        $region52: #{tpu_custom_call.1} parent=27 // pred_fallthru
          _
      $region28: #{tpu_custom_call.1} parent=5 // pred_fallthru
        _
      %p2073 = scmp.le.s32.totalorder 2, %s27
      // Predicated region
      $region53: #{tpu_custom_call.1} parent=5 // pred_check
        %p2074 = pneg %p2073
      $region54: #{tpu_custom_call.1} parent=5 // pred_check_branch
        %2076 = sbr.rel (%p2074) target = $region56
      $region55: #{tpu_custom_call.1} parent=5 // pred_region
        %s2077 = ssub.s32 %s27, 2
        // Predicated region
        $region57: #{tpu_custom_call.1} parent=55 // pred_check
          %p2078 = pneg %p108
        $region58: #{tpu_custom_call.1} parent=55 // pred_check_branch
          %2080 = sbr.rel (%p2078) target = $region60
        $region59: #{tpu_custom_call.1} parent=55 // pred_region
          %s2081 = sand.u32 %s93, 1
          %s2082 = scalar_lea.sflag [#allocation4], %s2081
          %s2083 = sand.u32 %s93, 1
          %s2084 = smul.addr %s2083, 128
          %s2085 = scalar_lea.vmem [#allocation7], %s2084
          %2087 = dma.done %s2082, 2048
        $region60: #{tpu_custom_call.1} parent=55 // pred_fallthru
          _
        // Predicated region
        $region61: #{tpu_custom_call.1} parent=55 // pred_check
          %p2088 = pneg %p134
        $region62: #{tpu_custom_call.1} parent=55 // pred_check_branch
          %2090 = sbr.rel (%p2088) target = $region64
        $region63: #{tpu_custom_call.1} parent=55 // pred_region
          %s2091 = sand.u32 %s33, 1
          %s2092 = scalar_lea.sflag [#allocation9], %s2091
          %s2093 = sand.u32 %s119, 1
          %s2094 = smul.addr %s2093, 128
          %s2095 = scalar_lea.vmem [#allocation8], %s2094
          %2097 = dma.done %s2092, 2048
        $region64: #{tpu_custom_call.1} parent=55 // pred_fallthru
          _
        // Predicated region
        $region65: #{tpu_custom_call.1} parent=55 // pred_check
          %p2098 = pneg %p160
        $region66: #{tpu_custom_call.1} parent=55 // pred_check_branch
          %2100 = sbr.rel (%p2098) target = $region68
        $region67: #{tpu_custom_call.1} parent=55 // pred_region
          %s2101 = sand.u32 %s33, 1
          %s2102 = scalar_lea.sflag [#allocation9], %s2101
          %s2103 = sand.u32 %s145, 1
          %s2104 = smul.addr %s2103, 128
          %s2105 = scalar_lea.vmem [#allocation10], %s2104
          %2107 = dma.done %s2102, 2048
        $region68: #{tpu_custom_call.1} parent=55 // pred_fallthru
          _
        // Predicated region
        $region69: #{tpu_custom_call.1} parent=55 // pred_check
          %p2108 = pneg %p186
        $region70: #{tpu_custom_call.1} parent=55 // pred_check_branch
          %2110 = sbr.rel (%p2108) target = $region72
        $region71: #{tpu_custom_call.1} parent=55 // pred_region
          %s2111 = sand.u32 %s171, 1
          %s2112 = scalar_lea.sflag [#allocation12], %s2111
          %s2113 = sand.u32 %s171, 1
          %s2114 = smul.addr %s2113, 128
          %s2115 = scalar_lea.vmem [#allocation11], %s2114
          %2117 = dma.done %s2112, 2048
        $region72: #{tpu_custom_call.1} parent=55 // pred_fallthru
          _
      $region56: #{tpu_custom_call.1} parent=5 // pred_fallthru
        _
    $region6: #{tpu_custom_call.1} parent=1 // loop_footer
      %s31 = sadd.s32 1, %s27
    $region7: #{tpu_custom_call.1} parent=1 // loop_footer_branch
      %26 = sbr.rel target = $region3
    $region8: #{tpu_custom_call.1} parent=1 // loop_exit
      _
    %2118 = vsyncpa [#allocation3], 1
    %s2119 = scalar_lea.sflag [#allocation3], 1
    %2120 = vsyncpa %s2119, 1
    %2121 = vsyncpa [#allocation6], 1
    %s2122 = scalar_lea.sflag [#allocation6], 1
    %2123 = vsyncpa %s2122, 1
    %2124 = vsyncpa [#allocation4], 1
    %s2125 = scalar_lea.sflag [#allocation4], 1
    %2126 = vsyncpa %s2125, 1
    %2127 = vsyncpa [#allocation9], 1
    %s2128 = scalar_lea.sflag [#allocation9], 1
    %2129 = vsyncpa %s2128, 1
    %2130 = vsyncpa [#allocation12], 1
    %s2131 = scalar_lea.sflag [#allocation12], 1
    %2132 = vsyncpa %s2131, 1

</llo_original>
